<compile_context>
chip_gen: v5e
topology: v5e:2x2
jax: 0.10.0
libtpu: 0.0.40
codegen_flags: <defaults>
</compile_context>

<pallas_src>
import functools

import jax
import jax.numpy as jnp
from jax.experimental import pallas as pl
from jax.experimental.pallas import tpu as pltpu

_VMEM_LIMIT = 48 * 1024 * 1024   # headroom over the 32 MiB scoped default, < v7x 64 MiB
_EPS = 1e-5


# ----------------------------------------------------------------------------
# tiling helpers
# ----------------------------------------------------------------------------
def _row_tile(R, target=512):
    """Row tile for flat (R, C) slabs: multiple of 16 dividing R, or R itself."""
    if R <= target:
        return R
    for tr in range(min(target, R), 15, -1):
        if R % tr == 0 and tr % 16 == 0:
            return tr
    return R


def _point_tile(N, target=256):
    """Point tile used where N ends up in the lane (last) dim: multiple of 128 or N."""
    if N <= target:
        return N
    for tn in range(min(target, N), 127, -1):
        if N % tn == 0 and tn % 128 == 0:
            return tn
    return N


def _bn_affine(pst, gamma, beta, inv_rows, eps):
    """Fold training-mode BN (biased var) into a per-channel scale/shift, (1, C)."""
    mean = pst[0:1, :] * inv_rows
    var = jnp.maximum(pst[1:2, :] * inv_rows - mean * mean, 0.0)
    scale = gamma * jax.lax.rsqrt(var + eps)
    shift = beta - mean * scale
    return scale, shift


def _accumulate_stats(st_ref, y):
    st_ref[...] += jnp.concatenate(
        [jnp.sum(y, axis=0, keepdims=True),
         jnp.sum(y * y, axis=0, keepdims=True)], axis=0)


# ----------------------------------------------------------------------------
# Kernel 1: KNN + grouping + pos_diff + channel concat, per (batch, point tile)
# ----------------------------------------------------------------------------
def _group_knn_kernel(p1_ref, p2_ref, src_ref, o_ref, *, nsample):
    p1 = p1_ref[0]                       # (TN, 3)  query xyz (fp32)
    p2 = p2_ref[0]                       # (3, S)   source xyz, channel-first (fp32)
    src = src_ref[0]                     # (Cg, S)  [feature2 ; pos2] channel-first (bf16)
    TN = p1.shape[0]
    S = p2.shape[1]
    Cg = src.shape[0]

    # squared-distance score; |p1|^2 is constant per query -> rank-invariant, dropped.
    sq2 = jnp.sum(p2 * p2, axis=0, keepdims=True)                      # (1, S)
    cross = jnp.dot(p1, p2, preferred_element_type=jnp.float32)        # (TN, S)
    score = sq2 - 2.0 * cross

    col = jax.lax.broadcasted_iota(jnp.int32, (TN, S), 1)
    # subtract query xyz from the last 3 (pos) channels of every gathered row
    sub = jnp.concatenate([jnp.zeros((TN, Cg - 3), jnp.float32), p1], axis=-1)

    dcur = score
    for k in range(nsample):
        dmin = jnp.min(dcur, axis=-1, keepdims=True)                   # (TN, 1)
        sel = dcur <= dmin
        imin = jnp.min(jnp.where(sel, col, S), axis=-1, keepdims=True)  # first-min index
        hit = col == imin                                              # (TN, S) one-hot
        onehot = hit.astype(jnp.bfloat16)
        gathered = jax.lax.dot_general(                                # (TN, Cg) gather via MXU
            onehot, src, dimension_numbers=(((1,), (1,)), ((), ())),
            preferred_element_type=jnp.float32)
        o_ref[0, k] = (gathered - sub).astype(o_ref.dtype)
        dcur = jnp.where(hit, jnp.float32(1e30), dcur)


def group_knn(pos1_t, pos2, src, nsample):
    """pos1_t: (B,N,3) fp32, pos2: (B,3,S) fp32, src: (B,C2+3,S) bf16
       -> (B, nsample, N, C2+3) bf16  (rows = [feature2_grouped ; pos_diff])."""
    B, N, _ = pos1_t.shape
    S = pos2.shape[2]
    Cg = src.shape[1]
    TN = _point_tile(N)
    return pl.pallas_call(
        functools.partial(_group_knn_kernel, nsample=nsample),
        out_shape=jax.ShapeDtypeStruct((B, nsample, N, Cg), jnp.bfloat16),
        grid=(B, N // TN),
        in_specs=[
            pl.BlockSpec((1, TN, 3), lambda b, n: (b, n, 0)),
            pl.BlockSpec((1, 3, S), lambda b, n: (b, 0, 0)),
            pl.BlockSpec((1, Cg, S), lambda b, n: (b, 0, 0)),
        ],
        out_specs=pl.BlockSpec((1, nsample, TN, Cg), lambda b, n: (b, 0, n, 0)),
        compiler_params=pltpu.CompilerParams(
            dimension_semantics=("parallel", "parallel"),
            vmem_limit_bytes=_VMEM_LIMIT),
    )(pos1_t, pos2, src)


# ----------------------------------------------------------------------------
# Kernel 2a: matmul (1x1 conv, no bias) + per-channel sum / sumsq accumulation
# ----------------------------------------------------------------------------
def _matmul_stats_kernel(x_ref, w_ref, y_ref, st_ref):
    @pl.when(pl.program_id(0) == 0)
    def _():
        st_ref[...] = jnp.zeros_like(st_ref)
    y = jnp.dot(x_ref[...].astype(jnp.bfloat16), w_ref[...],
                preferred_element_type=jnp.float32)
    y_ref[...] = y.astype(y_ref.dtype)
    _accumulate_stats(st_ref, y)


def matmul_stats(x, w, *, row_tile=512):
    R, Cin = x.shape
    Cout = w.shape[1]
    TR = _row_tile(R, row_tile)
    return pl.pallas_call(
        _matmul_stats_kernel,
        out_shape=(jax.ShapeDtypeStruct((R, Cout), jnp.bfloat16),
                   jax.ShapeDtypeStruct((2, Cout), jnp.float32)),
        grid=(R // TR,),
        in_specs=[pl.BlockSpec((TR, Cin), lambda r: (r, 0)),
                  pl.BlockSpec((Cin, Cout), lambda r: (0, 0))],
        out_specs=(pl.BlockSpec((TR, Cout), lambda r: (r, 0)),
                   pl.BlockSpec((2, Cout), lambda r: (0, 0))),
        compiler_params=pltpu.CompilerParams(
            dimension_semantics=("arbitrary",),
            vmem_limit_bytes=_VMEM_LIMIT),
    )(x, w)


# ----------------------------------------------------------------------------
# Kernel 2b: two-operand matmul (fused torch.cat([pooled, feature1])) + stats
# ----------------------------------------------------------------------------
def _matmul2_stats_kernel(xa_ref, xb_ref, wa_ref, wb_ref, y_ref, st_ref):
    @pl.when(pl.program_id(0) == 0)
    def _():
        st_ref[...] = jnp.zeros_like(st_ref)
    y = jnp.dot(xa_ref[...].astype(jnp.bfloat16), wa_ref[...],
                preferred_element_type=jnp.float32)
    y = y + jnp.dot(xb_ref[...].astype(jnp.bfloat16), wb_ref[...],
                    preferred_element_type=jnp.float32)
    y_ref[...] = y.astype(y_ref.dtype)
    _accumulate_stats(st_ref, y)


def matmul2_stats(xa, xb, wa, wb, *, row_tile=512):
    R, Ca = xa.shape
    Cb = xb.shape[1]
    Cout = wa.shape[1]
    TR = _row_tile(R, row_tile)
    return pl.pallas_call(
        _matmul2_stats_kernel,
        out_shape=(jax.ShapeDtypeStruct((R, Cout), jnp.bfloat16),
                   jax.ShapeDtypeStruct((2, Cout), jnp.float32)),
        grid=(R // TR,),
        in_specs=[pl.BlockSpec((TR, Ca), lambda r: (r, 0)),
                  pl.BlockSpec((TR, Cb), lambda r: (r, 0)),
                  pl.BlockSpec((Ca, Cout), lambda r: (0, 0)),
                  pl.BlockSpec((Cb, Cout), lambda r: (0, 0))],
        out_specs=(pl.BlockSpec((TR, Cout), lambda r: (r, 0)),
                   pl.BlockSpec((2, Cout), lambda r: (0, 0))),
        compiler_params=pltpu.CompilerParams(
            dimension_semantics=("arbitrary",),
            vmem_limit_bytes=_VMEM_LIMIT),
    )(xa, xb, wa, wb)


# ----------------------------------------------------------------------------
# Kernel 2c: previous-layer BN+ReLU fused into this layer's matmul + stats
# ----------------------------------------------------------------------------
def _bn_relu_matmul_stats_kernel(y_ref, pst_ref, g_ref, b_ref, w_ref,
                                 o_ref, st_ref, *, inv_rows, eps):
    @pl.when(pl.program_id(0) == 0)
    def _():
        st_ref[...] = jnp.zeros_like(st_ref)
    scale, shift = _bn_affine(pst_ref[...], g_ref[...], b_ref[...], inv_rows, eps)
    x = jnp.maximum(y_ref[...].astype(jnp.float32) * scale + shift, 0.0)
    y = jnp.dot(x.astype(jnp.bfloat16), w_ref[...],
                preferred_element_type=jnp.float32)
    o_ref[...] = y.astype(o_ref.dtype)
    _accumulate_stats(st_ref, y)


def bn_relu_matmul_stats(y, st, gamma, beta, w, *, prev_rows, row_tile=512, eps=_EPS):
    R, Cin = y.shape
    Cout = w.shape[1]
    TR = _row_tile(R, row_tile)
    kernel = functools.partial(_bn_relu_matmul_stats_kernel,
                               inv_rows=1.0 / prev_rows, eps=eps)
    return pl.pallas_call(
        kernel,
        out_shape=(jax.ShapeDtypeStruct((R, Cout), jnp.bfloat16),
                   jax.ShapeDtypeStruct((2, Cout), jnp.float32)),
        grid=(R // TR,),
        in_specs=[pl.BlockSpec((TR, Cin), lambda r: (r, 0)),
                  pl.BlockSpec((2, Cin), lambda r: (0, 0)),
                  pl.BlockSpec((1, Cin), lambda r: (0, 0)),
                  pl.BlockSpec((1, Cin), lambda r: (0, 0)),
                  pl.BlockSpec((Cin, Cout), lambda r: (0, 0))],
        out_specs=(pl.BlockSpec((TR, Cout), lambda r: (r, 0)),
                   pl.BlockSpec((2, Cout), lambda r: (0, 0))),
        compiler_params=pltpu.CompilerParams(
            dimension_semantics=("arbitrary",),
            vmem_limit_bytes=_VMEM_LIMIT),
    )(y, st, gamma, beta, w)


# ----------------------------------------------------------------------------
# Kernel 3: BN + ReLU + max over the K neighbours (end of the mlp1 chain)
# ----------------------------------------------------------------------------
def _bn_relu_maxpool_kernel(y_ref, pst_ref, g_ref, b_ref, o_ref, *, inv_rows, eps):
    scale, shift = _bn_affine(pst_ref[...], g_ref[...], b_ref[...], inv_rows, eps)
    scale3 = scale.reshape(1, 1, -1)
    shift3 = shift.reshape(1, 1, -1)
    x = jnp.maximum(y_ref[0].astype(jnp.float32) * scale3 + shift3, 0.0)  # (K, TP, C)
    o_ref[0] = jnp.max(x, axis=0).astype(o_ref.dtype)                     # (TP, C)


def bn_relu_maxpool(y, st, gamma, beta, *, prev_rows, eps=_EPS):
    """y: (B, K, N, C) bf16 (pre-BN) -> (B, N, C) bf16 (post BN+ReLU, max over K)."""
    B, K, N, C = y.shape
    TP = _row_tile(N, 256)
    kernel = functools.partial(_bn_relu_maxpool_kernel,
                               inv_rows=1.0 / prev_rows, eps=eps)
    return pl.pallas_call(
        kernel,
        out_shape=jax.ShapeDtypeStruct((B, N, C), jnp.bfloat16),
        grid=(B, N // TP),
        in_specs=[pl.BlockSpec((1, K, TP, C), lambda b, p: (b, 0, p, 0)),
                  pl.BlockSpec((2, C), lambda b, p: (0, 0)),
                  pl.BlockSpec((1, C), lambda b, p: (0, 0)),
                  pl.BlockSpec((1, C), lambda b, p: (0, 0))],
        out_specs=pl.BlockSpec((1, TP, C), lambda b, p: (b, p, 0)),
        compiler_params=pltpu.CompilerParams(
            dimension_semantics=("parallel", "parallel"),
            vmem_limit_bytes=_VMEM_LIMIT),
    )(y, st, gamma, beta)


# ----------------------------------------------------------------------------
# Kernel 4: BN + ReLU of the final layer, written channel-first (B, C, N)
# ----------------------------------------------------------------------------
def _bn_relu_transpose_kernel(y_ref, pst_ref, g_ref, b_ref, o_ref, *, inv_rows, eps):
    scale, shift = _bn_affine(pst_ref[...], g_ref[...], b_ref[...], inv_rows, eps)
    x = jnp.maximum(y_ref[0].astype(jnp.float32) * scale + shift, 0.0)    # (TP, C)
    o_ref[0] = x.T.astype(o_ref.dtype)                                    # (C, TP)


def bn_relu_transpose(y, st, gamma, beta, *, prev_rows, eps=_EPS):
    """y: (B, N, C) bf16 (pre-BN) -> (B, C, N) fp32 (post BN+ReLU, channel-first)."""
    B, N, C = y.shape
    TP = _point_tile(N)
    kernel = functools.partial(_bn_relu_transpose_kernel,
                               inv_rows=1.0 / prev_rows, eps=eps)
    return pl.pallas_call(
        kernel,
        out_shape=jax.ShapeDtypeStruct((B, C, N), jnp.float32),
        grid=(B, N // TP),
        in_specs=[pl.BlockSpec((1, TP, C), lambda b, p: (b, p, 0)),
                  pl.BlockSpec((2, C), lambda b, p: (0, 0)),
                  pl.BlockSpec((1, C), lambda b, p: (0, 0)),
                  pl.BlockSpec((1, C), lambda b, p: (0, 0))],
        out_specs=pl.BlockSpec((1, C, TP), lambda b, p: (b, 0, p)),
        compiler_params=pltpu.CompilerParams(
            dimension_semantics=("parallel", "parallel"),
            vmem_limit_bytes=_VMEM_LIMIT),
    )(y, st, gamma, beta)


# ----------------------------------------------------------------------------
# Module wrapper (parameter setup + layout glue in plain JAX)
# ----------------------------------------------------------------------------
class PointNetSetUpConv:
    def __init__(self, nsample, radius, f1_channel, f2_channel, mlp, mlp2, key, knn=True):
        # TODO(synk): query_ball_point (knn=False) radius-grouping path not implemented.
        assert knn, "only the knn=True branch is implemented"
        self.nsample = nsample
        self.radius = radius
        self.f1_channel = f1_channel
        self.f2_channel = f2_channel

        def _layer(key, cin, cout):
            bound = float(cin) ** -0.5                      # Conv default init range
            w = jax.random.uniform(key, (cin, cout), jnp.float32,
                                   -bound, bound).astype(jnp.bfloat16)
            gamma = jnp.ones((1, cout), jnp.float32)        # BatchNorm defaults
            beta = jnp.zeros((1, cout), jnp.float32)
            return w, gamma, beta

        self.mlp1_params = []
        last = f2_channel + 3
        for oc in mlp:
            key, kw = jax.random.split(key)
            self.mlp1_params.append(_layer(kw, last, oc))
            last = oc

        last = (mlp[-1] if len(mlp) != 0 else f2_channel + 3) + f1_channel
        self.mlp2_params = []
        for oc in mlp2:
            key, kw = jax.random.split(key)
            self.mlp2_params.append(_layer(kw, last, oc))
            last = oc

    def __call__(self, pos1, pos2, feature1, feature2):
        """pos1: [B,3,N], pos2: [B,3,S], feature1: [B,C1,N] or None,
        feature2: [B,C2,S]  ->  [B, out_channels, N] (channel-first, fp32)."""
        B, _, N = pos1.shape
        S = pos2.shape[2]
        C2 = feature2.shape[1]
        K = self.nsample
        Cg = C2 + 3

        # tiny (B,3,N) transpose; the grouped-feature/pos_diff columns need point-major xyz
        pos1_t = jnp.transpose(pos1, (0, 2, 1))                                 # (B, N, 3)
        src = jnp.concatenate([feature2, pos2], axis=1).astype(jnp.bfloat16)    # (B, C2+3, S)

        grouped = group_knn(pos1_t, pos2, src, K)            # (B, K, N, C2+3) bf16
        R1 = B * K * N

        # ---- mlp1 chain (Conv2d 1x1 + BN2d + ReLU), then max over K ----
        if self.mlp1_params:
            w0, g_prev, b_prev = self.mlp1_params[0]
            y, st = matmul_stats(grouped.reshape(R1, Cg), w0)
            for (w, g, b) in self.mlp1_params[1:]:
                y, st = bn_relu_matmul_stats(y, st, g_prev, b_prev, w, prev_rows=R1)
                g_prev, b_prev = g, b
            Cp = y.shape[-1]
            pooled = bn_relu_maxpool(y.reshape(B, K, N, Cp), st, g_prev, b_prev,
                                     prev_rows=R1)           # (B, N, Cp) bf16
        else:
            Cp = Cg
            pooled = jnp.max(grouped, axis=1)                # (B, N, Cg)

        R2 = B * N
        pooled2 = pooled.reshape(R2, Cp)

        # ---- skip connection + mlp2 chain (Conv1d 1x1 + BN1d + ReLU) ----
        if not self.mlp2_params:
            out = jnp.transpose(pooled.astype(jnp.float32), (0, 2, 1))   # (B, Cp, N)
            if feature1 is not None:
                out = jnp.concatenate([out, feature1], axis=1)
            return out

        w0, g_prev, b_prev = self.mlp2_params[0]
        if feature1 is not None:
            C1 = feature1.shape[1]
            f1t = jnp.transpose(feature1, (0, 2, 1)).reshape(R2, C1)
            # fused torch.cat([pooled, feature1], dim=1): split W row-wise
            y, st = matmul2_stats(pooled2, f1t, w0[:Cp], w0[Cp:])
        else:
            y, st = matmul_stats(pooled2, w0[:Cp])
        for (w, g, b) in self.mlp2_params[1:]:
            y, st = bn_relu_matmul_stats(y, st, g_prev, b_prev, w, prev_rows=R2)
            g_prev, b_prev = g, b

        Co = y.shape[-1]
        return bn_relu_transpose(y.reshape(B, N, Co), st, g_prev, b_prev,
                                 prev_rows=R2)               # (B, Co, N) fp32


if __name__ == "__main__":
    key = jax.random.PRNGKey(0)
    B, N, S = 2, 64, 16
    C1, C2 = 16, 16
    nsample = 8
    mlp, mlp2 = [32, 32], [64, 64]

    k1, k2, k3, k4, k5 = jax.random.split(key, 5)
    pos1 = jax.random.normal(k1, (B, 3, N), jnp.float32)
    pos2 = jax.random.normal(k2, (B, 3, S), jnp.float32)
    feature1 = jax.random.normal(k3, (B, C1, N), jnp.float32)
    feature2 = jax.random.normal(k4, (B, C2, S), jnp.float32)

    module = PointNetSetUpConv(nsample=nsample, radius=2.4,
                               f1_channel=C1, f2_channel=C2,
                               mlp=mlp, mlp2=mlp2, key=k5)
    out = module(pos1, pos2, feature1, feature2)
    out = jax.block_until_ready(out)

    assert out.shape == (B, mlp2[-1], N), out.shape
    assert bool(jnp.all(jnp.isfinite(out)))
    print("KERNEL_OK")
</pallas_src>

<mosaic_0001>
module attributes {stable_mosaic.version = 11 : i64} {
  func.func @_group_knn_kernel(%arg0: i32, %arg1: i32, %arg2: memref<1x64x3xf32, #tpu.memory_space<vmem>>, %arg3: memref<1x3x16xf32, #tpu.memory_space<vmem>>, %arg4: memref<1x19x16xbf16, #tpu.memory_space<vmem>>, %arg5: memref<1x8x64x19xbf16, #tpu.memory_space<vmem>>) attributes {dimension_semantics = [#tpu.dimension_semantics<parallel>, #tpu.dimension_semantics<parallel>], iteration_bounds = array<i64: 2, 1>, scalar_prefetch = 0 : i64, scratch_operands = 0 : i64, tpu.core_type = #tpu.core_type<tc>, window_params = [{transform_indices = @transform_0, window_bounds = array<i64: 1, 64, 3>}, {transform_indices = @transform_1, window_bounds = array<i64: 1, 3, 16>}, {transform_indices = @transform_2, window_bounds = array<i64: 1, 19, 16>}, {transform_indices = @transform_3, window_bounds = array<i64: 1, 8, 64, 19>}]} {
    %c0 = arith.constant 0 : index
    %c0_0 = arith.constant 0 : index
    %c0_1 = arith.constant 0 : index
    %0 = vector.load %arg2[%c0, %c0_0, %c0_1] : memref<1x64x3xf32, #tpu.memory_space<vmem>>, vector<1x64x3xf32>
    %1 = vector.shape_cast %0 : vector<1x64x3xf32> to vector<64x3xf32>
    %c0_2 = arith.constant 0 : index
    %c0_3 = arith.constant 0 : index
    %c0_4 = arith.constant 0 : index
    %2 = vector.load %arg3[%c0_2, %c0_3, %c0_4] : memref<1x3x16xf32, #tpu.memory_space<vmem>>, vector<1x3x16xf32>
    %3 = vector.shape_cast %2 : vector<1x3x16xf32> to vector<3x16xf32>
    %c0_5 = arith.constant 0 : index
    %c0_6 = arith.constant 0 : index
    %c0_7 = arith.constant 0 : index
    %4 = vector.load %arg4[%c0_5, %c0_6, %c0_7] : memref<1x19x16xbf16, #tpu.memory_space<vmem>>, vector<1x19x16xbf16>
    %5 = vector.shape_cast %4 : vector<1x19x16xbf16> to vector<19x16xbf16>
    %6 = arith.mulf %3, %3 : vector<3x16xf32>
    %cst = arith.constant dense<0.000000e+00> : vector<16xf32>
    %7 = vector.multi_reduction <add>, %6, %cst [0] : vector<3x16xf32> to vector<16xf32>
    %8 = vector.shape_cast %7 : vector<16xf32> to vector<1x16xf32>
    %cst_8 = arith.constant dense<0.000000e+00> : vector<64x16xf32>
    %9 = tpu.matmul %1, %3, %cst_8 {dimension_numbers = #tpu.dot_dimension_numbers<[1], [0], [0], [1], [0, 0, 1, 1], [], []>} : vector<64x3xf32>, vector<3x16xf32>, vector<64x16xf32> -> vector<64x16xf32>
    %cst_9 = arith.constant 2.000000e+00 : f32
    %10 = vector.broadcast %cst_9 : f32 to vector<64x16xf32>
    %11 = arith.mulf %10, %9 : vector<64x16xf32>
    %12 = vector.broadcast %8 : vector<1x16xf32> to vector<64x16xf32>
    %13 = arith.subf %12, %11 : vector<64x16xf32>
    %14 = tpu.iota {dimensions = array<i32: 1>} : vector<64x16xi32>
    %cst_10 = arith.constant 0.000000e+00 : f32
    %15 = vector.broadcast %cst_10 : f32 to vector<64x16xf32>
    %16 = tpu.concatenate %15, %1 in 1 : vector<64x16xf32>, vector<64x3xf32> -> vector<64x19xf32>
    %cst_11 = arith.constant dense<0x7F800000> : vector<64xf32>
    %17 = vector.multi_reduction <minimumf>, %13, %cst_11 [1] : vector<64x16xf32> to vector<64xf32>
    %18 = vector.shape_cast %17 : vector<64xf32> to vector<64x1xf32>
    %19 = vector.broadcast %18 : vector<64x1xf32> to vector<64x16xf32>
    %20 = arith.cmpf ole, %13, %19 : vector<64x16xf32>
    %c16_i32 = arith.constant 16 : i32
    %21 = vector.broadcast %c16_i32 : i32 to vector<64x16xi32>
    %22 = arith.select %20, %14, %21 : vector<64x16xi1>, vector<64x16xi32>
    %cst_12 = arith.constant dense<2147483647> : vector<64xi32>
    %23 = vector.multi_reduction <minsi>, %22, %cst_12 [1] : vector<64x16xi32> to vector<64xi32>
    %24 = vector.shape_cast %23 : vector<64xi32> to vector<64x1xi32>
    %25 = vector.broadcast %24 : vector<64x1xi32> to vector<64x16xi32>
    %26 = arith.cmpi eq, %14, %25 : vector<64x16xi32>
    %27 = arith.extui %26 : vector<64x16xi1> to vector<64x16xi32>
    %28 = arith.sitofp %27 : vector<64x16xi32> to vector<64x16xf32>
    %29 = arith.truncf %28 : vector<64x16xf32> to vector<64x16xbf16>
    %cst_13 = arith.constant dense<0.000000e+00> : vector<64x19xf32>
    %30 = tpu.matmul %29, %5, %cst_13 {dimension_numbers = #tpu.dot_dimension_numbers<[1], [1], [0], [0], [0, 0, 1, 0], [], []>} : vector<64x16xbf16>, vector<19x16xbf16>, vector<64x19xf32> -> vector<64x19xf32>
    %31 = arith.subf %30, %16 : vector<64x19xf32>
    %32 = arith.truncf %31 : vector<64x19xf32> to vector<64x19xbf16>
    %c0_14 = arith.constant 0 : index
    %c0_15 = arith.constant 0 : index
    %c0_16 = arith.constant 0 : index
    %c0_17 = arith.constant 0 : index
    %33 = vector.load %arg5[%c0_14, %c0_15, %c0_16, %c0_17] : memref<1x8x64x19xbf16, #tpu.memory_space<vmem>>, vector<1x1x64x19xbf16>
    %34 = vector.shape_cast %33 : vector<1x1x64x19xbf16> to vector<64x19xbf16>
    %35 = vector.shape_cast %32 : vector<64x19xbf16> to vector<1x1x64x19xbf16>
    tpu.vector_store %arg5[%c0_14, %c0_15, %c0_16, %c0_17], %35 {strides = array<i32>} : memref<1x8x64x19xbf16, #tpu.memory_space<vmem>>, vector<1x1x64x19xbf16>,
    %cst_18 = arith.constant 1.000000e+30 : f32
    %36 = vector.broadcast %cst_18 : f32 to vector<64x16xf32>
    %37 = arith.select %26, %36, %13 : vector<64x16xi1>, vector<64x16xf32>
    %cst_19 = arith.constant dense<0x7F800000> : vector<64xf32>
    %38 = vector.multi_reduction <minimumf>, %37, %cst_19 [1] : vector<64x16xf32> to vector<64xf32>
    %39 = vector.shape_cast %38 : vector<64xf32> to vector<64x1xf32>
    %40 = vector.broadcast %39 : vector<64x1xf32> to vector<64x16xf32>
    %41 = arith.cmpf ole, %37, %40 : vector<64x16xf32>
    %c16_i32_20 = arith.constant 16 : i32
    %42 = vector.broadcast %c16_i32_20 : i32 to vector<64x16xi32>
    %43 = arith.select %41, %14, %42 : vector<64x16xi1>, vector<64x16xi32>
    %cst_21 = arith.constant dense<2147483647> : vector<64xi32>
    %44 = vector.multi_reduction <minsi>, %43, %cst_21 [1] : vector<64x16xi32> to vector<64xi32>
    %45 = vector.shape_cast %44 : vector<64xi32> to vector<64x1xi32>
    %46 = vector.broadcast %45 : vector<64x1xi32> to vector<64x16xi32>
    %47 = arith.cmpi eq, %14, %46 : vector<64x16xi32>
    %48 = arith.extui %47 : vector<64x16xi1> to vector<64x16xi32>
    %49 = arith.sitofp %48 : vector<64x16xi32> to vector<64x16xf32>
    %50 = arith.truncf %49 : vector<64x16xf32> to vector<64x16xbf16>
    %cst_22 = arith.constant dense<0.000000e+00> : vector<64x19xf32>
    %51 = tpu.matmul %50, %5, %cst_22 {dimension_numbers = #tpu.dot_dimension_numbers<[1], [1], [0], [0], [0, 0, 1, 0], [], []>} : vector<64x16xbf16>, vector<19x16xbf16>, vector<64x19xf32> -> vector<64x19xf32>
    %52 = arith.subf %51, %16 : vector<64x19xf32>
    %53 = arith.truncf %52 : vector<64x19xf32> to vector<64x19xbf16>
    %c0_23 = arith.constant 0 : index
    %c1 = arith.constant 1 : index
    %c0_24 = arith.constant 0 : index
    %c0_25 = arith.constant 0 : index
    %54 = vector.load %arg5[%c0_23, %c1, %c0_24, %c0_25] : memref<1x8x64x19xbf16, #tpu.memory_space<vmem>>, vector<1x1x64x19xbf16>
    %55 = vector.shape_cast %54 : vector<1x1x64x19xbf16> to vector<64x19xbf16>
    %56 = vector.shape_cast %53 : vector<64x19xbf16> to vector<1x1x64x19xbf16>
    tpu.vector_store %arg5[%c0_23, %c1, %c0_24, %c0_25], %56 {strides = array<i32>} : memref<1x8x64x19xbf16, #tpu.memory_space<vmem>>, vector<1x1x64x19xbf16>,
    %cst_26 = arith.constant 1.000000e+30 : f32
    %57 = vector.broadcast %cst_26 : f32 to vector<64x16xf32>
    %58 = arith.select %47, %57, %37 : vector<64x16xi1>, vector<64x16xf32>
    %cst_27 = arith.constant dense<0x7F800000> : vector<64xf32>
    %59 = vector.multi_reduction <minimumf>, %58, %cst_27 [1] : vector<64x16xf32> to vector<64xf32>
    %60 = vector.shape_cast %59 : vector<64xf32> to vector<64x1xf32>
    %61 = vector.broadcast %60 : vector<64x1xf32> to vector<64x16xf32>
    %62 = arith.cmpf ole, %58, %61 : vector<64x16xf32>
    %c16_i32_28 = arith.constant 16 : i32
    %63 = vector.broadcast %c16_i32_28 : i32 to vector<64x16xi32>
    %64 = arith.select %62, %14, %63 : vector<64x16xi1>, vector<64x16xi32>
    %cst_29 = arith.constant dense<2147483647> : vector<64xi32>
    %65 = vector.multi_reduction <minsi>, %64, %cst_29 [1] : vector<64x16xi32> to vector<64xi32>
    %66 = vector.shape_cast %65 : vector<64xi32> to vector<64x1xi32>
    %67 = vector.broadcast %66 : vector<64x1xi32> to vector<64x16xi32>
    %68 = arith.cmpi eq, %14, %67 : vector<64x16xi32>
    %69 = arith.extui %68 : vector<64x16xi1> to vector<64x16xi32>
    %70 = arith.sitofp %69 : vector<64x16xi32> to vector<64x16xf32>
    %71 = arith.truncf %70 : vector<64x16xf32> to vector<64x16xbf16>
    %cst_30 = arith.constant dense<0.000000e+00> : vector<64x19xf32>
    %72 = tpu.matmul %71, %5, %cst_30 {dimension_numbers = #tpu.dot_dimension_numbers<[1], [1], [0], [0], [0, 0, 1, 0], [], []>} : vector<64x16xbf16>, vector<19x16xbf16>, vector<64x19xf32> -> vector<64x19xf32>
    %73 = arith.subf %72, %16 : vector<64x19xf32>
    %74 = arith.truncf %73 : vector<64x19xf32> to vector<64x19xbf16>
    %c0_31 = arith.constant 0 : index
    %c2 = arith.constant 2 : index
    %c0_32 = arith.constant 0 : index
    %c0_33 = arith.constant 0 : index
    %75 = vector.load %arg5[%c0_31, %c2, %c0_32, %c0_33] : memref<1x8x64x19xbf16, #tpu.memory_space<vmem>>, vector<1x1x64x19xbf16>
    %76 = vector.shape_cast %75 : vector<1x1x64x19xbf16> to vector<64x19xbf16>
    %77 = vector.shape_cast %74 : vector<64x19xbf16> to vector<1x1x64x19xbf16>
    tpu.vector_store %arg5[%c0_31, %c2, %c0_32, %c0_33], %77 {strides = array<i32>} : memref<1x8x64x19xbf16, #tpu.memory_space<vmem>>, vector<1x1x64x19xbf16>,
    %cst_34 = arith.constant 1.000000e+30 : f32
    %78 = vector.broadcast %cst_34 : f32 to vector<64x16xf32>
    %79 = arith.select %68, %78, %58 : vector<64x16xi1>, vector<64x16xf32>
    %cst_35 = arith.constant dense<0x7F800000> : vector<64xf32>
    %80 = vector.multi_reduction <minimumf>, %79, %cst_35 [1] : vector<64x16xf32> to vector<64xf32>
    %81 = vector.shape_cast %80 : vector<64xf32> to vector<64x1xf32>
    %82 = vector.broadcast %81 : vector<64x1xf32> to vector<64x16xf32>
    %83 = arith.cmpf ole, %79, %82 : vector<64x16xf32>
    %c16_i32_36 = arith.constant 16 : i32
    %84 = vector.broadcast %c16_i32_36 : i32 to vector<64x16xi32>
    %85 = arith.select %83, %14, %84 : vector<64x16xi1>, vector<64x16xi32>
    %cst_37 = arith.constant dense<2147483647> : vector<64xi32>
    %86 = vector.multi_reduction <minsi>, %85, %cst_37 [1] : vector<64x16xi32> to vector<64xi32>
    %87 = vector.shape_cast %86 : vector<64xi32> to vector<64x1xi32>
    %88 = vector.broadcast %87 : vector<64x1xi32> to vector<64x16xi32>
    %89 = arith.cmpi eq, %14, %88 : vector<64x16xi32>
    %90 = arith.extui %89 : vector<64x16xi1> to vector<64x16xi32>
    %91 = arith.sitofp %90 : vector<64x16xi32> to vector<64x16xf32>
    %92 = arith.truncf %91 : vector<64x16xf32> to vector<64x16xbf16>
    %cst_38 = arith.constant dense<0.000000e+00> : vector<64x19xf32>
    %93 = tpu.matmul %92, %5, %cst_38 {dimension_numbers = #tpu.dot_dimension_numbers<[1], [1], [0], [0], [0, 0, 1, 0], [], []>} : vector<64x16xbf16>, vector<19x16xbf16>, vector<64x19xf32> -> vector<64x19xf32>
    %94 = arith.subf %93, %16 : vector<64x19xf32>
    %95 = arith.truncf %94 : vector<64x19xf32> to vector<64x19xbf16>
    %c0_39 = arith.constant 0 : index
    %c3 = arith.constant 3 : index
    %c0_40 = arith.constant 0 : index
    %c0_41 = arith.constant 0 : index
    %96 = vector.load %arg5[%c0_39, %c3, %c0_40, %c0_41] : memref<1x8x64x19xbf16, #tpu.memory_space<vmem>>, vector<1x1x64x19xbf16>
    %97 = vector.shape_cast %96 : vector<1x1x64x19xbf16> to vector<64x19xbf16>
    %98 = vector.shape_cast %95 : vector<64x19xbf16> to vector<1x1x64x19xbf16>
    tpu.vector_store %arg5[%c0_39, %c3, %c0_40, %c0_41], %98 {strides = array<i32>} : memref<1x8x64x19xbf16, #tpu.memory_space<vmem>>, vector<1x1x64x19xbf16>,
    %cst_42 = arith.constant 1.000000e+30 : f32
    %99 = vector.broadcast %cst_42 : f32 to vector<64x16xf32>
    %100 = arith.select %89, %99, %79 : vector<64x16xi1>, vector<64x16xf32>
    %cst_43 = arith.constant dense<0x7F800000> : vector<64xf32>
    %101 = vector.multi_reduction <minimumf>, %100, %cst_43 [1] : vector<64x16xf32> to vector<64xf32>
    %102 = vector.shape_cast %101 : vector<64xf32> to vector<64x1xf32>
    %103 = vector.broadcast %102 : vector<64x1xf32> to vector<64x16xf32>
    %104 = arith.cmpf ole, %100, %103 : vector<64x16xf32>
    %c16_i32_44 = arith.constant 16 : i32
    %105 = vector.broadcast %c16_i32_44 : i32 to vector<64x16xi32>
    %106 = arith.select %104, %14, %105 : vector<64x16xi1>, vector<64x16xi32>
    %cst_45 = arith.constant dense<2147483647> : vector<64xi32>
    %107 = vector.multi_reduction <minsi>, %106, %cst_45 [1] : vector<64x16xi32> to vector<64xi32>
    %108 = vector.shape_cast %107 : vector<64xi32> to vector<64x1xi32>
    %109 = vector.broadcast %108 : vector<64x1xi32> to vector<64x16xi32>
    %110 = arith.cmpi eq, %14, %109 : vector<64x16xi32>
    %111 = arith.extui %110 : vector<64x16xi1> to vector<64x16xi32>
    %112 = arith.sitofp %111 : vector<64x16xi32> to vector<64x16xf32>
    %113 = arith.truncf %112 : vector<64x16xf32> to vector<64x16xbf16>
    %cst_46 = arith.constant dense<0.000000e+00> : vector<64x19xf32>
    %114 = tpu.matmul %113, %5, %cst_46 {dimension_numbers = #tpu.dot_dimension_numbers<[1], [1], [0], [0], [0, 0, 1, 0], [], []>} : vector<64x16xbf16>, vector<19x16xbf16>, vector<64x19xf32> -> vector<64x19xf32>
    %115 = arith.subf %114, %16 : vector<64x19xf32>
    %116 = arith.truncf %115 : vector<64x19xf32> to vector<64x19xbf16>
    %c0_47 = arith.constant 0 : index
    %c4 = arith.constant 4 : index
    %c0_48 = arith.constant 0 : index
    %c0_49 = arith.constant 0 : index
    %117 = vector.load %arg5[%c0_47, %c4, %c0_48, %c0_49] : memref<1x8x64x19xbf16, #tpu.memory_space<vmem>>, vector<1x1x64x19xbf16>
    %118 = vector.shape_cast %117 : vector<1x1x64x19xbf16> to vector<64x19xbf16>
    %119 = vector.shape_cast %116 : vector<64x19xbf16> to vector<1x1x64x19xbf16>
    tpu.vector_store %arg5[%c0_47, %c4, %c0_48, %c0_49], %119 {strides = array<i32>} : memref<1x8x64x19xbf16, #tpu.memory_space<vmem>>, vector<1x1x64x19xbf16>,
    %cst_50 = arith.constant 1.000000e+30 : f32
    %120 = vector.broadcast %cst_50 : f32 to vector<64x16xf32>
    %121 = arith.select %110, %120, %100 : vector<64x16xi1>, vector<64x16xf32>
    %cst_51 = arith.constant dense<0x7F800000> : vector<64xf32>
    %122 = vector.multi_reduction <minimumf>, %121, %cst_51 [1] : vector<64x16xf32> to vector<64xf32>
    %123 = vector.shape_cast %122 : vector<64xf32> to vector<64x1xf32>
    %124 = vector.broadcast %123 : vector<64x1xf32> to vector<64x16xf32>
    %125 = arith.cmpf ole, %121, %124 : vector<64x16xf32>
    %c16_i32_52 = arith.constant 16 : i32
    %126 = vector.broadcast %c16_i32_52 : i32 to vector<64x16xi32>
    %127 = arith.select %125, %14, %126 : vector<64x16xi1>, vector<64x16xi32>
    %cst_53 = arith.constant dense<2147483647> : vector<64xi32>
    %128 = vector.multi_reduction <minsi>, %127, %cst_53 [1] : vector<64x16xi32> to vector<64xi32>
    %129 = vector.shape_cast %128 : vector<64xi32> to vector<64x1xi32>
    %130 = vector.broadcast %129 : vector<64x1xi32> to vector<64x16xi32>
    %131 = arith.cmpi eq, %14, %130 : vector<64x16xi32>
    %132 = arith.extui %131 : vector<64x16xi1> to vector<64x16xi32>
    %133 = arith.sitofp %132 : vector<64x16xi32> to vector<64x16xf32>
    %134 = arith.truncf %133 : vector<64x16xf32> to vector<64x16xbf16>
    %cst_54 = arith.constant dense<0.000000e+00> : vector<64x19xf32>
    %135 = tpu.matmul %134, %5, %cst_54 {dimension_numbers = #tpu.dot_dimension_numbers<[1], [1], [0], [0], [0, 0, 1, 0], [], []>} : vector<64x16xbf16>, vector<19x16xbf16>, vector<64x19xf32> -> vector<64x19xf32>
    %136 = arith.subf %135, %16 : vector<64x19xf32>
    %137 = arith.truncf %136 : vector<64x19xf32> to vector<64x19xbf16>
    %c0_55 = arith.constant 0 : index
    %c5 = arith.constant 5 : index
    %c0_56 = arith.constant 0 : index
    %c0_57 = arith.constant 0 : index
    %138 = vector.load %arg5[%c0_55, %c5, %c0_56, %c0_57] : memref<1x8x64x19xbf16, #tpu.memory_space<vmem>>, vector<1x1x64x19xbf16>
    %139 = vector.shape_cast %138 : vector<1x1x64x19xbf16> to vector<64x19xbf16>
    %140 = vector.shape_cast %137 : vector<64x19xbf16> to vector<1x1x64x19xbf16>
    tpu.vector_store %arg5[%c0_55, %c5, %c0_56, %c0_57], %140 {strides = array<i32>} : memref<1x8x64x19xbf16, #tpu.memory_space<vmem>>, vector<1x1x64x19xbf16>,
    %cst_58 = arith.constant 1.000000e+30 : f32
    %141 = vector.broadcast %cst_58 : f32 to vector<64x16xf32>
    %142 = arith.select %131, %141, %121 : vector<64x16xi1>, vector<64x16xf32>
    %cst_59 = arith.constant dense<0x7F800000> : vector<64xf32>
    %143 = vector.multi_reduction <minimumf>, %142, %cst_59 [1] : vector<64x16xf32> to vector<64xf32>
    %144 = vector.shape_cast %143 : vector<64xf32> to vector<64x1xf32>
    %145 = vector.broadcast %144 : vector<64x1xf32> to vector<64x16xf32>
    %146 = arith.cmpf ole, %142, %145 : vector<64x16xf32>
    %c16_i32_60 = arith.constant 16 : i32
    %147 = vector.broadcast %c16_i32_60 : i32 to vector<64x16xi32>
    %148 = arith.select %146, %14, %147 : vector<64x16xi1>, vector<64x16xi32>
    %cst_61 = arith.constant dense<2147483647> : vector<64xi32>
    %149 = vector.multi_reduction <minsi>, %148, %cst_61 [1] : vector<64x16xi32> to vector<64xi32>
    %150 = vector.shape_cast %149 : vector<64xi32> to vector<64x1xi32>
    %151 = vector.broadcast %150 : vector<64x1xi32> to vector<64x16xi32>
    %152 = arith.cmpi eq, %14, %151 : vector<64x16xi32>
    %153 = arith.extui %152 : vector<64x16xi1> to vector<64x16xi32>
    %154 = arith.sitofp %153 : vector<64x16xi32> to vector<64x16xf32>
    %155 = arith.truncf %154 : vector<64x16xf32> to vector<64x16xbf16>
    %cst_62 = arith.constant dense<0.000000e+00> : vector<64x19xf32>
    %156 = tpu.matmul %155, %5, %cst_62 {dimension_numbers = #tpu.dot_dimension_numbers<[1], [1], [0], [0], [0, 0, 1, 0], [], []>} : vector<64x16xbf16>, vector<19x16xbf16>, vector<64x19xf32> -> vector<64x19xf32>
    %157 = arith.subf %156, %16 : vector<64x19xf32>
    %158 = arith.truncf %157 : vector<64x19xf32> to vector<64x19xbf16>
    %c0_63 = arith.constant 0 : index
    %c6 = arith.constant 6 : index
    %c0_64 = arith.constant 0 : index
    %c0_65 = arith.constant 0 : index
    %159 = vector.load %arg5[%c0_63, %c6, %c0_64, %c0_65] : memref<1x8x64x19xbf16, #tpu.memory_space<vmem>>, vector<1x1x64x19xbf16>
    %160 = vector.shape_cast %159 : vector<1x1x64x19xbf16> to vector<64x19xbf16>
    %161 = vector.shape_cast %158 : vector<64x19xbf16> to vector<1x1x64x19xbf16>
    tpu.vector_store %arg5[%c0_63, %c6, %c0_64, %c0_65], %161 {strides = array<i32>} : memref<1x8x64x19xbf16, #tpu.memory_space<vmem>>, vector<1x1x64x19xbf16>,
    %cst_66 = arith.constant 1.000000e+30 : f32
    %162 = vector.broadcast %cst_66 : f32 to vector<64x16xf32>
    %163 = arith.select %152, %162, %142 : vector<64x16xi1>, vector<64x16xf32>
    %cst_67 = arith.constant dense<0x7F800000> : vector<64xf32>
    %164 = vector.multi_reduction <minimumf>, %163, %cst_67 [1] : vector<64x16xf32> to vector<64xf32>
    %165 = vector.shape_cast %164 : vector<64xf32> to vector<64x1xf32>
    %166 = vector.broadcast %165 : vector<64x1xf32> to vector<64x16xf32>
    %167 = arith.cmpf ole, %163, %166 : vector<64x16xf32>
    %c16_i32_68 = arith.constant 16 : i32
    %168 = vector.broadcast %c16_i32_68 : i32 to vector<64x16xi32>
    %169 = arith.select %167, %14, %168 : vector<64x16xi1>, vector<64x16xi32>
    %cst_69 = arith.constant dense<2147483647> : vector<64xi32>
    %170 = vector.multi_reduction <minsi>, %169, %cst_69 [1] : vector<64x16xi32> to vector<64xi32>
    %171 = vector.shape_cast %170 : vector<64xi32> to vector<64x1xi32>
    %172 = vector.broadcast %171 : vector<64x1xi32> to vector<64x16xi32>
    %173 = arith.cmpi eq, %14, %172 : vector<64x16xi32>
    %174 = arith.extui %173 : vector<64x16xi1> to vector<64x16xi32>
    %175 = arith.sitofp %174 : vector<64x16xi32> to vector<64x16xf32>
    %176 = arith.truncf %175 : vector<64x16xf32> to vector<64x16xbf16>
    %cst_70 = arith.constant dense<0.000000e+00> : vector<64x19xf32>
    %177 = tpu.matmul %176, %5, %cst_70 {dimension_numbers = #tpu.dot_dimension_numbers<[1], [1], [0], [0], [0, 0, 1, 0], [], []>} : vector<64x16xbf16>, vector<19x16xbf16>, vector<64x19xf32> -> vector<64x19xf32>
    %178 = arith.subf %177, %16 : vector<64x19xf32>
    %179 = arith.truncf %178 : vector<64x19xf32> to vector<64x19xbf16>
    %c0_71 = arith.constant 0 : index
    %c7 = arith.constant 7 : index
    %c0_72 = arith.constant 0 : index
    %c0_73 = arith.constant 0 : index
    %180 = vector.load %arg5[%c0_71, %c7, %c0_72, %c0_73] : memref<1x8x64x19xbf16, #tpu.memory_space<vmem>>, vector<1x1x64x19xbf16>
    %181 = vector.shape_cast %180 : vector<1x1x64x19xbf16> to vector<64x19xbf16>
    %182 = vector.shape_cast %179 : vector<64x19xbf16> to vector<1x1x64x19xbf16>
    tpu.vector_store %arg5[%c0_71, %c7, %c0_72, %c0_73], %182 {strides = array<i32>} : memref<1x8x64x19xbf16, #tpu.memory_space<vmem>>, vector<1x1x64x19xbf16>,
    return
  }
  func.func @transform_0(%arg0: i32, %arg1: i32) -> (i32, i32, i32) {
    %c0_i32 = arith.constant 0 : i32
    %c0_i32_0 = arith.constant 0 : i32
    return %arg0, %arg1, %c0_i32 : i32, i32, i32
  }
  func.func @transform_1(%arg0: i32, %arg1: i32) -> (i32, i32, i32) {
    %c0_i32 = arith.constant 0 : i32
    %c0_i32_0 = arith.constant 0 : i32
    %c0_i32_1 = arith.constant 0 : i32
    return %arg0, %c0_i32, %c0_i32_0 : i32, i32, i32
  }
  func.func @transform_2(%arg0: i32, %arg1: i32) -> (i32, i32, i32) {
    %c0_i32 = arith.constant 0 : i32
    %c0_i32_0 = arith.constant 0 : i32
    %c0_i32_1 = arith.constant 0 : i32
    return %arg0, %c0_i32, %c0_i32_0 : i32, i32, i32
  }
  func.func @transform_3(%arg0: i32, %arg1: i32) -> (i32, i32, i32, i32) {
    %c0_i32 = arith.constant 0 : i32
    %c0_i32_0 = arith.constant 0 : i32
    %c0_i32_1 = arith.constant 0 : i32
    return %arg0, %c0_i32, %arg1, %c0_i32_0 : i32, i32, i32, i32
  }
}

</mosaic_0001>

<llo_original>
// kernel: tpu_custom_call.1
$region0: #{tpu_custom_call.1}
  #allocation0 [shape = 'u32[]', space=smem, size = 0x4, offset = 0x4, fixed_abs, tag = 'smem constant byte address 0x4 - core index']
  #allocation1 [shape = 'u32[72,128]{1,0:T(1,128)}', space=vmem, size = 0x9000, scoped, tag = 'internal scratch']
  %s0 = inlined_call_operand.vmem [shape: f32[2,64,3], index: 0, kind: input, shape index: {}]
  %s1 = inlined_call_operand.vmem [shape: f32[2,3,16], index: 1, kind: input, shape index: {}]
  %s2 = inlined_call_operand.vmem [shape: bf16[2,19,16], index: 2, kind: input, shape index: {}]
  %s3 = inlined_call_operand.vmem [shape: bf16[2,8,64,19], index: 3, kind: output, shape index: {}]
  %s4 = sld [smem:[#allocation0]]
  $region45: #{tpu_custom_call.1} parent=0
    _
  %s6 = ssub.s32 1, %s4
  %s7 = scalar_select 0, %s6, %s4
  loop: start=0, step=1, limit=4
  $region2: #{tpu_custom_call.1} parent=0 // loop_pre_header
    _
  $region3: #{tpu_custom_call.1} parent=0 // loop_header
    %s9 = sphi 0, %s13
    %p10 = scmp.ge.s32.totalorder %s9, 4
    %s16 = sphi 0, %s28
    %s17 = sphi 0, %s24
    %s18 = sphi 0, %s16
    %s19 = sphi 0, %s17
    %s20 = sphi 0, %s18
    %s21 = sphi 0, %s19
    %s33 = sphi 0, %s35
    %s36 = sphi 0, %s33
    %s37 = sphi 0, %s36
    %s53 = sphi 0, %s37
    %s59 = sphi 0, %s61
    %s62 = sphi 0, %s59
    %s63 = sphi 0, %s62
    %s79 = sphi 0, %s63
    %s85 = sphi 0, %s87
    %s88 = sphi 0, %s85
    %s89 = sphi 0, %s88
    %s105 = sphi 0, %s89
    %s113 = sphi 0, %s115
    %s116 = sphi 0, %s113
    %s117 = sphi 0, %s116
    %s133 = sphi 0, %s117
  $region4: #{tpu_custom_call.1} parent=0 // loop_header_branch
    %12 = sbr.rel (%p10) target = $region8
  $region5: #{tpu_custom_call.1} parent=0 // loop_body
    %s14 = ssub.s32 %s9, 1
    %s15 = ssub.s32 %s9, 2
    %s22 = sadd.s32 1, %s17
    %p23 = scmp.ge.s32.totalorder %s22, 1
    %s24 = scalar_select %p23, 0, %s22
    %s25 = sadd.s32 1, %s16
    %s26 = scalar_select %p23, %s25, %s16
    %p27 = scmp.ge.s32.totalorder %s26, 2
    %s28 = scalar_select %p27, 0, %s26
    %s29 = ssub.s32 %s16, %s28
    %s30 = ssub.s32 %s17, %s24
    %s31 = sor.u32 %s29, %s30
    %p32 = scmp.eq.s32.totalorder %s31, 0
    %s34 = sadd.s32 %s33, 1
    %s35 = scalar_select %p32, %s33, %s34
    %p38 = pneg %p32
    %p39 = scmp.eq.s32.totalorder %s9, 1
    %p40 = por %p38, %p39
    %p41 = scmp.ne.s32.totalorder %s33, %s36
    %p42 = scmp.eq.s32.totalorder %s9, 0
    %p43 = por %p41, %p42
    %p44 = scmp.ne.s32.totalorder %s33, %s36
    %p45 = scmp.eq.s32.totalorder %s14, 1
    %p46 = por %p44, %p45
    %p47 = scmp.ne.s32.totalorder %s36, %s37
    %p48 = scmp.eq.s32.totalorder %s14, 0
    %p49 = por %p47, %p48
    %p50 = scmp.ne.s32.totalorder %s36, %s37
    %p51 = scmp.eq.s32.totalorder %s15, 1
    %p52 = por %p50, %p51
    %p54 = scmp.ne.s32.totalorder %s37, %s53
    %p55 = scmp.eq.s32.totalorder %s15, 0
    %p56 = por %p54, %p55
    %s57 = ssub.s32 %s16, %s28
    %p58 = scmp.eq.s32.totalorder %s57, 0
    %s60 = sadd.s32 %s59, 1
    %s61 = scalar_select %p58, %s59, %s60
    %p64 = pneg %p58
    %p65 = scmp.eq.s32.totalorder %s9, 1
    %p66 = por %p64, %p65
    %p67 = scmp.ne.s32.totalorder %s59, %s62
    %p68 = scmp.eq.s32.totalorder %s9, 0
    %p69 = por %p67, %p68
    %p70 = scmp.ne.s32.totalorder %s59, %s62
    %p71 = scmp.eq.s32.totalorder %s14, 1
    %p72 = por %p70, %p71
    %p73 = scmp.ne.s32.totalorder %s62, %s63
    %p74 = scmp.eq.s32.totalorder %s14, 0
    %p75 = por %p73, %p74
    %p76 = scmp.ne.s32.totalorder %s62, %s63
    %p77 = scmp.eq.s32.totalorder %s15, 1
    %p78 = por %p76, %p77
    %p80 = scmp.ne.s32.totalorder %s63, %s79
    %p81 = scmp.eq.s32.totalorder %s15, 0
    %p82 = por %p80, %p81
    %s83 = ssub.s32 %s16, %s28
    %p84 = scmp.eq.s32.totalorder %s83, 0
    %s86 = sadd.s32 %s85, 1
    %s87 = scalar_select %p84, %s85, %s86
    %p90 = pneg %p84
    %p91 = scmp.eq.s32.totalorder %s9, 1
    %p92 = por %p90, %p91
    %p93 = scmp.ne.s32.totalorder %s85, %s88
    %p94 = scmp.eq.s32.totalorder %s9, 0
    %p95 = por %p93, %p94
    %p96 = scmp.ne.s32.totalorder %s85, %s88
    %p97 = scmp.eq.s32.totalorder %s14, 1
    %p98 = por %p96, %p97
    %p99 = scmp.ne.s32.totalorder %s88, %s89
    %p100 = scmp.eq.s32.totalorder %s14, 0
    %p101 = por %p99, %p100
    %p102 = scmp.ne.s32.totalorder %s88, %s89
    %p103 = scmp.eq.s32.totalorder %s15, 1
    %p104 = por %p102, %p103
    %p106 = scmp.ne.s32.totalorder %s89, %s105
    %p107 = scmp.eq.s32.totalorder %s15, 0
    %p108 = por %p106, %p107
    %s109 = ssub.s32 %s16, %s28
    %s110 = ssub.s32 %s17, %s24
    %s111 = sor.u32 %s109, %s110
    %p112 = scmp.eq.s32.totalorder %s111, 0
    %s114 = sadd.s32 %s113, 1
    %s115 = scalar_select %p112, %s113, %s114
    %p118 = pneg %p112
    %p119 = scmp.eq.s32.totalorder %s9, 1
    %p120 = por %p118, %p119
    %p121 = scmp.ne.s32.totalorder %s113, %s116
    %p122 = scmp.eq.s32.totalorder %s9, 0
    %p123 = por %p121, %p122
    %p124 = scmp.ne.s32.totalorder %s113, %s116
    %p125 = scmp.eq.s32.totalorder %s14, 1
    %p126 = por %p124, %p125
    %p127 = scmp.ne.s32.totalorder %s116, %s117
    %p128 = scmp.eq.s32.totalorder %s14, 0
    %p129 = por %p127, %p128
    %p130 = scmp.ne.s32.totalorder %s116, %s117
    %p131 = scmp.eq.s32.totalorder %s15, 1
    %p132 = por %p130, %p131
    %p134 = scmp.ne.s32.totalorder %s117, %s133
    %p135 = scmp.eq.s32.totalorder %s15, 0
    %p136 = por %p134, %p135
    %p137 = scmp.le.s32.totalorder 1, %s9
    %p138 = scmp.lt.s32.totalorder %s9, 3
    %p139 = pnand %p137, %p138
    %p140 = pneg %p139
    // Predicated region
    $region9: #{tpu_custom_call.1} parent=5 // pred_check
      _
    $region10: #{tpu_custom_call.1} parent=5 // pred_check_branch
      %142 = sbr.rel (%p139) target = $region12
    $region11: #{tpu_custom_call.1} parent=5 // pred_region
      %s143 = ssub.s32 %s9, 1
    $region12: #{tpu_custom_call.1} parent=5 // pred_fallthru
      _
    %p144 = scmp.lt.s32.totalorder %s9, 2
    // Predicated region
    $region13: #{tpu_custom_call.1} parent=5 // pred_check
      %p145 = pneg %p144
    $region14: #{tpu_custom_call.1} parent=5 // pred_check_branch
      %147 = sbr.rel (%p145) target = $region16
    $region15: #{tpu_custom_call.1} parent=5 // pred_region
      // Predicated region
      $region17: #{tpu_custom_call.1} parent=15 // pred_check
        %p148 = pneg %p43
      $region18: #{tpu_custom_call.1} parent=15 // pred_check_branch
        %150 = sbr.rel (%p148) target = $region20
      $region19: #{tpu_custom_call.1} parent=15 // pred_region
        %s151 = smul.u32 8, %s17
        %p152 = scmp.lt.s32.totalorder %s16, 1
        %s153 = scalar_select %p152, %s16, 1
        %p154 = scmp.lt.s32.totalorder %s151, 7
        %s155 = scalar_select %p154, %s151, 7
        %s156 = smul.addr %s153, 8
        %s157 = sadd.s32 %s155, %s156
        %s158 = smul.addr %s157, 8
        %s159 = scalar_lea.vmem %s0, %s158
        %s160 = smul.u32 8, %s17
      $region20: #{tpu_custom_call.1} parent=15 // pred_fallthru
        _
      // Predicated region
      $region21: #{tpu_custom_call.1} parent=15 // pred_check
        %p161 = pneg %p69
      $region22: #{tpu_custom_call.1} parent=15 // pred_check_branch
        %163 = sbr.rel (%p161) target = $region24
      $region23: #{tpu_custom_call.1} parent=15 // pred_region
        %p164 = scmp.lt.s32.totalorder %s16, 1
        %s165 = scalar_select %p164, %s16, 1
        %s166 = smul.addr %s165, 4
        %s167 = scalar_lea.vmem %s1, %s166
      $region24: #{tpu_custom_call.1} parent=15 // pred_fallthru
        _
      // Predicated region
      $region25: #{tpu_custom_call.1} parent=15 // pred_check
        %p168 = pneg %p95
      $region26: #{tpu_custom_call.1} parent=15 // pred_check_branch
        %170 = sbr.rel (%p168) target = $region28
      $region27: #{tpu_custom_call.1} parent=15 // pred_region
        %p171 = scmp.lt.s32.totalorder %s16, 1
        %s172 = scalar_select %p171, %s16, 1
        %s173 = smul.addr %s172, 3
        %s174 = smul.addr %s173, 4
        %s175 = scalar_lea.vmem %s2, %s174
      $region28: #{tpu_custom_call.1} parent=15 // pred_fallthru
        _
    $region16: #{tpu_custom_call.1} parent=5 // pred_fallthru
      _
    %p176 = scmp.le.s32.totalorder 1, %s9
    %p177 = scmp.lt.s32.totalorder %s9, 3
    %p178 = pnand %p176, %p177
    %p179 = pneg %p178
    // Predicated region
    $region29: #{tpu_custom_call.1} parent=5 // pred_check
      _
    $region30: #{tpu_custom_call.1} parent=5 // pred_check_branch
      %181 = sbr.rel (%p178) target = $region32
    $region31: #{tpu_custom_call.1} parent=5 // pred_region
      %s182 = ssub.s32 %s9, 1
      %s183 = smul.u32 8, %s19
      %p184 = scmp.lt.s32.totalorder %s18, 1
      %s185 = scalar_select %p184, %s18, 1
      %p186 = scmp.lt.s32.totalorder %s183, 7
      %s187 = scalar_select %p186, %s183, 7
      %s188 = smul.addr %s185, 8
      %s189 = sadd.s32 %s187, %s188
      %s190 = smul.addr %s189, 8
      %s191 = scalar_lea.vmem %s0, %s190
      %p192 = pneg %p49
      %p193 = pneg %p46
      %p194 = scmp.lt.s32.totalorder %s18, 1
      %s195 = scalar_select %p194, %s18, 1
      %s196 = smul.addr %s195, 4
      %s197 = scalar_lea.vmem %s1, %s196
      %p198 = pneg %p75
      %p199 = pneg %p72
      %p200 = scmp.lt.s32.totalorder %s18, 1
      %s201 = scalar_select %p200, %s18, 1
      %s202 = smul.addr %s201, 3
      %s203 = smul.addr %s202, 4
      %s204 = scalar_lea.vmem %s2, %s203
      %p205 = pneg %p101
      %p206 = pneg %p98
      %p207 = pneg %p129
      %p208 = pneg %p126
      %s209 = smul.u32 8, %s19
      %p210 = scmp.lt.s32.totalorder %s18, 1
      %s211 = scalar_select %p210, %s18, 1
      %p212 = scmp.lt.s32.totalorder %s209, 7
      %s213 = scalar_select %p212, %s209, 7
      %s214 = smul.addr %s211, 64
      %s215 = sadd.s32 %s213, %s214
      %s216 = smul.addr %s215, 4
      %s217 = scalar_lea.vmem %s3, %s216
      %s218 = smul.u32 8, %s19
      %p219 = scmp.lt.s32.totalorder %s18, 1
      %s220 = scalar_select %p219, %s18, 1
      %p221 = scmp.lt.s32.totalorder %s218, 7
      %s222 = scalar_select %p221, %s218, 7
      %s223 = smul.addr %s220, 8
      %s224 = sadd.s32 %s222, %s223
      %s225 = smul.addr %s224, 8
      %s226 = scalar_lea.vmem %s0, %s225
      %s227 = smul.u32 8, %s19
      %p228 = scmp.lt.s32.totalorder %s18, 1
      %s229 = scalar_select %p228, %s18, 1
      %s230 = smul.addr %s229, 4
      %s231 = scalar_lea.vmem %s1, %s230
      %p232 = scmp.lt.s32.totalorder %s18, 1
      %s233 = scalar_select %p232, %s18, 1
      %s234 = smul.addr %s233, 3
      %s235 = smul.addr %s234, 4
      %s236 = scalar_lea.vmem %s2, %s235
      %s237 = smul.u32 8, %s19
      %p238 = scmp.lt.s32.totalorder %s18, 1
      %s239 = scalar_select %p238, %s18, 1
      %p240 = scmp.lt.s32.totalorder %s237, 7
      %s241 = scalar_select %p240, %s237, 7
      %s242 = smul.addr %s239, 64
      %s243 = sadd.s32 %s241, %s242
      %s244 = smul.addr %s243, 4
      %s245 = scalar_lea.vmem %s3, %s244
      %s246 = smul.u32 8, %s19
      %v248 = vld [vmem:[%s226] sm:$0xff]
      %v249 = vld [vmem:[%s226 + $0x8] sm:$0xff]
      %v250 = vld [vmem:[%s226 + $0x10] sm:$0xff]
      %v251 = vld [vmem:[%s226 + $0x18] sm:$0xff]
      %v252 = vld [vmem:[%s226 + $0x20] sm:$0xff]
      %v253 = vld [vmem:[%s226 + $0x28] sm:$0xff]
      %v254 = vld [vmem:[%s226 + $0x30] sm:$0xff]
      %v255 = vld [vmem:[%s226 + $0x38] sm:$0xff]
      %v256 = vld [vmem:[%s231] sm:$0x7]
      %v257 = vld [vmem:[%s236] sm:$0xf]
      %v258 = vld [vmem:[%s236 + $0x4] sm:$0xf]
      %v259 = vld [vmem:[%s236 + $0x8] sm:$0x3]
      %v260 = vmul.f32 %v256, %v256
      %vm261 = vcmask 124928
      %v262 = vsel %vm261, %v260, 0.0
      %v263 = vrot.slane %v262, 4
      %v264 = vadd.f32 %v262, %v263
      %v265 = vrot.slane %v264, 2
      %v266 = vadd.f32 %v264, %v265
      %v267 = vrot.slane %v266, 1
      %v268 = vadd.f32 %v266, %v267
      %vm269 = vcmask 23552
      %v271 = vsel %vm269, %v248, 0
      %v274 = vsel %vm269, %v249, 0
      %v277 = vsel %vm269, %v250, 0
      %v280 = vsel %vm269, %v251, 0
      %v283 = vsel %vm269, %v252, 0
      %v286 = vsel %vm269, %v253, 0
      %v289 = vsel %vm269, %v254, 0
      %v292 = vsel %vm269, %v255, 0
      %vm294 = vcmask 1042432
      %v296 = vsel %vm294, %v256, 0
      %298 = vmatpush.msra.mxu0 0.0
      %299 = vmatpush.msra.mxu0 0.0
      %300 = vmatpush.msra.mxu0 0.0
      %301 = vmatpush.msra.mxu0 0.0
      %302 = vmatpush.msra.mxu0 0.0
      %303 = vmatpush.msra.mxu0 0.0
      %304 = vmatpush.msra.mxu0 0.0
      %305 = vmatpush.msra.mxu0 0.0
      %306 = vmatpush.msra.mxu0 0.0
      %307 = vmatpush.msra.mxu0 0.0
      %308 = vmatpush.msra.mxu0 0.0
      %309 = vmatpush.msra.mxu0 0.0
      %310 = vmatpush.msra.mxu0 0.0
      %311 = vmatpush.msra.mxu0 0.0
      %312 = vmatpush.msra.mxu0 0.0
      %313 = vmatpush.msra.mxu0 %v296
      %314 = vmatmul.f32.gmra.mxu0 %v271
      %v315 = vpop.f32.mrf.mxu0
      %v316 = vadd.f32 0.0, %v315
      %317 = vmatmul.f32.gmra.mxu0 %v274
      %v318 = vpop.f32.mrf.mxu0
      %v319 = vadd.f32 0.0, %v318
      %320 = vmatmul.f32.gmra.mxu0 %v277
      %v321 = vpop.f32.mrf.mxu0
      %v322 = vadd.f32 0.0, %v321
      %323 = vmatmul.f32.gmra.mxu0 %v280
      %v324 = vpop.f32.mrf.mxu0
      %v325 = vadd.f32 0.0, %v324
      %326 = vmatmul.f32.gmra.mxu0 %v283
      %v327 = vpop.f32.mrf.mxu0
      %v328 = vadd.f32 0.0, %v327
      %329 = vmatmul.f32.gmra.mxu0 %v286
      %v330 = vpop.f32.mrf.mxu0
      %v331 = vadd.f32 0.0, %v330
      %332 = vmatmul.f32.gmra.mxu0 %v289
      %v333 = vpop.f32.mrf.mxu0
      %v334 = vadd.f32 0.0, %v333
      %335 = vmatmul.f32.gmra.mxu0 %v292
      %v336 = vpop.f32.mrf.mxu0
      %v337 = vadd.f32 0.0, %v336
      %338 = vdwg.mxu0
      %v339 = vmul.f32 %v316, 2.0
      %v340 = vmul.f32 %v319, 2.0
      %v341 = vmul.f32 %v322, 2.0
      %v342 = vmul.f32 %v325, 2.0
      %v343 = vmul.f32 %v328, 2.0
      %v344 = vmul.f32 %v331, 2.0
      %v345 = vmul.f32 %v334, 2.0
      %v346 = vmul.f32 %v337, 2.0
      %v347 = vsub.f32 %v268, %v339
      %v348 = vsub.f32 %v268, %v340
      %v349 = vsub.f32 %v268, %v341
      %v350 = vsub.f32 %v268, %v342
      %v351 = vsub.f32 %v268, %v343
      %v352 = vsub.f32 %v268, %v344
      %v353 = vsub.f32 %v268, %v345
      %v354 = vsub.f32 %v268, %v346
      %v355 = vlaneseq
      %v356 = vand.u32 %v355, 127
      %357 = vrot.lane.b32.xlu0 %v248, 16
      %v358 = vpop.permute.xlu0 %357
      %359 = vrot.lane.b32.xlu0 %v249, 16
      %v360 = vpop.permute.xlu0 %359
      %361 = vrot.lane.b32.xlu0 %v250, 16
      %v362 = vpop.permute.xlu0 %361
      %363 = vrot.lane.b32.xlu0 %v251, 16
      %v364 = vpop.permute.xlu0 %363
      %365 = vrot.lane.b32.xlu0 %v252, 16
      %v366 = vpop.permute.xlu0 %365
      %367 = vrot.lane.b32.xlu0 %v253, 16
      %v368 = vpop.permute.xlu0 %367
      %369 = vrot.lane.b32.xlu0 %v254, 16
      %v370 = vpop.permute.xlu0 %369
      %371 = vrot.lane.b32.xlu0 %v255, 16
      %v372 = vpop.permute.xlu0 %371
      %vm381 = vcmask 130048
      %v382 = vsel %vm381, 0.0, %v358
      %v383 = vsel %vm381, 0.0, %v360
      %v384 = vsel %vm381, 0.0, %v362
      %v385 = vsel %vm381, 0.0, %v364
      %v386 = vsel %vm381, 0.0, %v366
      %v387 = vsel %vm381, 0.0, %v368
      %v388 = vsel %vm381, 0.0, %v370
      %v389 = vsel %vm381, 0.0, %v372
      %v390 = vsel %vm381, %v347, inf
      %391 = vmin.xlane.f32.xlu0 %v390
      %v392 = vpop.xlane.xlu0 %391
      %v393 = vsel %vm381, %v348, inf
      %394 = vmin.xlane.f32.xlu0 %v393
      %v395 = vpop.xlane.xlu0 %394
      %v396 = vsel %vm381, %v349, inf
      %397 = vmin.xlane.f32.xlu0 %v396
      %v398 = vpop.xlane.xlu0 %397
      %v399 = vsel %vm381, %v350, inf
      %400 = vmin.xlane.f32.xlu0 %v399
      %v401 = vpop.xlane.xlu0 %400
      %v402 = vsel %vm381, %v351, inf
      %403 = vmin.xlane.f32.xlu0 %v402
      %v404 = vpop.xlane.xlu0 %403
      %v405 = vsel %vm381, %v352, inf
      %406 = vmin.xlane.f32.xlu0 %v405
      %v407 = vpop.xlane.xlu0 %406
      %v408 = vsel %vm381, %v353, inf
      %409 = vmin.xlane.f32.xlu0 %v408
      %v410 = vpop.xlane.xlu0 %409
      %v411 = vsel %vm381, %v354, inf
      %412 = vmin.xlane.f32.xlu0 %v411
      %v413 = vpop.xlane.xlu0 %412
      %vm414 = vcmp.le.f32.partialorder %v347, %v392
      %vm415 = vcmp.le.f32.partialorder %v348, %v395
      %vm416 = vcmp.le.f32.partialorder %v349, %v398
      %vm417 = vcmp.le.f32.partialorder %v350, %v401
      %vm418 = vcmp.le.f32.partialorder %v351, %v404
      %vm419 = vcmp.le.f32.partialorder %v352, %v407
      %vm420 = vcmp.le.f32.partialorder %v353, %v410
      %vm421 = vcmp.le.f32.partialorder %v354, %v413
      %v422 = vsel %vm414, %v356, 16
      %v423 = vsel %vm415, %v356, 16
      %v424 = vsel %vm416, %v356, 16
      %v425 = vsel %vm417, %v356, 16
      %v426 = vsel %vm418, %v356, 16
      %v427 = vsel %vm419, %v356, 16
      %v428 = vsel %vm420, %v356, 16
      %v429 = vsel %vm421, %v356, 16
      %v430 = vsel %vm381, %v422, 2147483647
      %v431 = vand.u32 %v430, 65535
      %v432 = vshra.s32 %v430, 16
      %v433 = vcvt.s32.f32 %v431
      %v434 = vcvt.s32.f32 %v432
      %435 = vmin.xlane.f32.xlu0 %v434
      %v436 = vpop.xlane.xlu0 %435
      %vm437 = vcmp.eq.f32.partialorder %v434, %v436
      %v438 = vsel %vm437, %v433, inf
      %439 = vmin.xlane.f32.xlu0 %v438
      %v440 = vpop.xlane.xlu0 %439
      %v441 = vcvt.f32.s32 %v440
      %v442 = vcvt.f32.s32 %v436
      %v443 = vshll.u32 %v442, 16
      %v444 = vadd.s32 %v443, %v441
      %v445 = vsel %vm381, %v423, 2147483647
      %v446 = vand.u32 %v445, 65535
      %v447 = vshra.s32 %v445, 16
      %v448 = vcvt.s32.f32 %v446
      %v449 = vcvt.s32.f32 %v447
      %450 = vmin.xlane.f32.xlu0 %v449
      %v451 = vpop.xlane.xlu0 %450
      %vm452 = vcmp.eq.f32.partialorder %v449, %v451
      %v453 = vsel %vm452, %v448, inf
      %454 = vmin.xlane.f32.xlu0 %v453
      %v455 = vpop.xlane.xlu0 %454
      %v456 = vcvt.f32.s32 %v455
      %v457 = vcvt.f32.s32 %v451
      %v458 = vshll.u32 %v457, 16
      %v459 = vadd.s32 %v458, %v456
      %v460 = vsel %vm381, %v424, 2147483647
      %v461 = vand.u32 %v460, 65535
      %v462 = vshra.s32 %v460, 16
      %v463 = vcvt.s32.f32 %v461
      %v464 = vcvt.s32.f32 %v462
      %465 = vmin.xlane.f32.xlu0 %v464
      %v466 = vpop.xlane.xlu0 %465
      %vm467 = vcmp.eq.f32.partialorder %v464, %v466
      %v468 = vsel %vm467, %v463, inf
      %469 = vmin.xlane.f32.xlu0 %v468
      %v470 = vpop.xlane.xlu0 %469
      %v471 = vcvt.f32.s32 %v470
      %v472 = vcvt.f32.s32 %v466
      %v473 = vshll.u32 %v472, 16
      %v474 = vadd.s32 %v473, %v471
      %v475 = vsel %vm381, %v425, 2147483647
      %v476 = vand.u32 %v475, 65535
      %v477 = vshra.s32 %v475, 16
      %v478 = vcvt.s32.f32 %v476
      %v479 = vcvt.s32.f32 %v477
      %480 = vmin.xlane.f32.xlu0 %v479
      %v481 = vpop.xlane.xlu0 %480
      %vm482 = vcmp.eq.f32.partialorder %v479, %v481
      %v483 = vsel %vm482, %v478, inf
      %484 = vmin.xlane.f32.xlu0 %v483
      %v485 = vpop.xlane.xlu0 %484
      %v486 = vcvt.f32.s32 %v485
      %v487 = vcvt.f32.s32 %v481
      %v488 = vshll.u32 %v487, 16
      %v489 = vadd.s32 %v488, %v486
      %v490 = vsel %vm381, %v426, 2147483647
      %v491 = vand.u32 %v490, 65535
      %v492 = vshra.s32 %v490, 16
      %v493 = vcvt.s32.f32 %v491
      %v494 = vcvt.s32.f32 %v492
      %495 = vmin.xlane.f32.xlu0 %v494
      %v496 = vpop.xlane.xlu0 %495
      %vm497 = vcmp.eq.f32.partialorder %v494, %v496
      %v498 = vsel %vm497, %v493, inf
      %499 = vmin.xlane.f32.xlu0 %v498
      %v500 = vpop.xlane.xlu0 %499
      %v501 = vcvt.f32.s32 %v500
      %v502 = vcvt.f32.s32 %v496
      %v503 = vshll.u32 %v502, 16
      %v504 = vadd.s32 %v503, %v501
      %v505 = vsel %vm381, %v427, 2147483647
      %v506 = vand.u32 %v505, 65535
      %v507 = vshra.s32 %v505, 16
      %v508 = vcvt.s32.f32 %v506
      %v509 = vcvt.s32.f32 %v507
      %510 = vmin.xlane.f32.xlu0 %v509
      %v511 = vpop.xlane.xlu0 %510
      %vm512 = vcmp.eq.f32.partialorder %v509, %v511
      %v513 = vsel %vm512, %v508, inf
      %514 = vmin.xlane.f32.xlu0 %v513
      %v515 = vpop.xlane.xlu0 %514
      %v516 = vcvt.f32.s32 %v515
      %v517 = vcvt.f32.s32 %v511
      %v518 = vshll.u32 %v517, 16
      %v519 = vadd.s32 %v518, %v516
      %v520 = vsel %vm381, %v428, 2147483647
      %v521 = vand.u32 %v520, 65535
      %v522 = vshra.s32 %v520, 16
      %v523 = vcvt.s32.f32 %v521
      %v524 = vcvt.s32.f32 %v522
      %525 = vmin.xlane.f32.xlu0 %v524
      %v526 = vpop.xlane.xlu0 %525
      %vm527 = vcmp.eq.f32.partialorder %v524, %v526
      %v528 = vsel %vm527, %v523, inf
      %529 = vmin.xlane.f32.xlu0 %v528
      %v530 = vpop.xlane.xlu0 %529
      %v531 = vcvt.f32.s32 %v530
      %v532 = vcvt.f32.s32 %v526
      %v533 = vshll.u32 %v532, 16
      %v534 = vadd.s32 %v533, %v531
      %v535 = vsel %vm381, %v429, 2147483647
      %v536 = vand.u32 %v535, 65535
      %v537 = vshra.s32 %v535, 16
      %v538 = vcvt.s32.f32 %v536
      %v539 = vcvt.s32.f32 %v537
      %540 = vmin.xlane.f32.xlu0 %v539
      %v541 = vpop.xlane.xlu0 %540
      %vm542 = vcmp.eq.f32.partialorder %v539, %v541
      %v543 = vsel %vm542, %v538, inf
      %544 = vmin.xlane.f32.xlu0 %v543
      %v545 = vpop.xlane.xlu0 %544
      %v546 = vcvt.f32.s32 %v545
      %v547 = vcvt.f32.s32 %v541
      %v548 = vshll.u32 %v547, 16
      %v549 = vadd.s32 %v548, %v546
      %vm550 = vcmp.eq.s32.totalorder %v356, %v444
      %vm551 = vcmp.eq.s32.totalorder %v356, %v459
      %vm552 = vcmp.eq.s32.totalorder %v356, %v474
      %vm553 = vcmp.eq.s32.totalorder %v356, %v489
      %vm554 = vcmp.eq.s32.totalorder %v356, %v504
      %vm555 = vcmp.eq.s32.totalorder %v356, %v519
      %vm556 = vcmp.eq.s32.totalorder %v356, %v534
      %vm557 = vcmp.eq.s32.totalorder %v356, %v549
      %v558 = vsel %vm550, 1, 0
      %v559 = vsel %vm551, 1, 0
      %v560 = vsel %vm552, 1, 0
      %v561 = vsel %vm553, 1, 0
      %v562 = vsel %vm554, 1, 0
      %v563 = vsel %vm555, 1, 0
      %v564 = vsel %vm556, 1, 0
      %v565 = vsel %vm557, 1, 0
      %v566 = vcvt.s32.f32 %v558
      %v567 = vcvt.s32.f32 %v559
      %v568 = vcvt.s32.f32 %v560
      %v569 = vcvt.s32.f32 %v561
      %v570 = vcvt.s32.f32 %v562
      %v571 = vcvt.s32.f32 %v563
      %v572 = vcvt.s32.f32 %v564
      %v573 = vcvt.s32.f32 %v565
      %v574 = vpack.c.bf16 %v567, %v566
      %v575 = vpack.c.bf16 %v569, %v568
      %v576 = vpack.c.bf16 %v571, %v570
      %v577 = vpack.c.bf16 %v573, %v572
      %v581 = vunpack.c.l.b16 %v257
      %v582 = vunpack.c.l.b16 %v258
      %v583 = vunpack.c.l.b16 %v259
      %v584 = vpack.c.b16 %v582, %v581
      %v585 = vpack.c.b16 %v583, %v583
      %v587 = vsel %vm381, %v574, 0
      %v590 = vsel %vm381, %v575, 0
      %v593 = vsel %vm381, %v576, 0
      %v596 = vsel %vm381, %v577, 0
      %v599 = vsel %vm381, %v584, 0
      %v602 = vsel %vm381, %v585, 0
      %604 = vmatpush.bf16.xpose.msra.mxu0 0
      %605 = vmatpush.bf16.xpose.msra.mxu0 0
      %606 = vmatpush.bf16.xpose.msra.mxu0 0
      %607 = vmatpush.bf16.xpose.msra.mxu0 0
      %608 = vmatpush.bf16.xpose.msra.mxu0 0
      %609 = vmatpush.bf16.xpose.msra.mxu0 0
      %610 = vmatpush.bf16.xpose.msra.mxu0 %v602
      %611 = vmatpush.bf16.xpose.msra.mxu0 %v599
      %612 = vmatmul.bf16.gmra.mxu0 %v587
      %v613 = vpop.f32.mrf.mxu0
      %v614 = vadd.f32 0.0, %v613
      %v615 = vpop.f32.mrf.mxu0
      %v616 = vadd.f32 0.0, %v615
      %617 = vmatmul.bf16.gmra.mxu0 %v590
      %v618 = vpop.f32.mrf.mxu0
      %v619 = vadd.f32 0.0, %v618
      %v620 = vpop.f32.mrf.mxu0
      %v621 = vadd.f32 0.0, %v620
      %622 = vmatmul.bf16.gmra.mxu0 %v593
      %v623 = vpop.f32.mrf.mxu0
      %v624 = vadd.f32 0.0, %v623
      %v625 = vpop.f32.mrf.mxu0
      %v626 = vadd.f32 0.0, %v625
      %627 = vmatmul.bf16.gmra.mxu0 %v596
      %v628 = vpop.f32.mrf.mxu0
      %v629 = vadd.f32 0.0, %v628
      %v630 = vpop.f32.mrf.mxu0
      %v631 = vadd.f32 0.0, %v630
      %632 = vdwg.mxu0
      %v633 = vsub.f32 %v614, %v382
      %v634 = vsub.f32 %v616, %v383
      %v635 = vsub.f32 %v619, %v384
      %v636 = vsub.f32 %v621, %v385
      %v637 = vsub.f32 %v624, %v386
      %v638 = vsub.f32 %v626, %v387
      %v639 = vsub.f32 %v629, %v388
      %v640 = vsub.f32 %v631, %v389
      %v641 = vpack.c.bf16 %v633, %v633
      %v642 = vpack.c.bf16 %v634, %v634
      %v643 = vpack.c.bf16 %v635, %v635
      %v644 = vpack.c.bf16 %v636, %v636
      %v645 = vpack.c.bf16 %v637, %v637
      %v646 = vpack.c.bf16 %v638, %v638
      %v647 = vpack.c.bf16 %v639, %v639
      %v648 = vpack.c.bf16 %v640, %v640
      %vm649 = vcmask 150528
      %650 = vst.msk [vmem:[%s245] sm:$0xf] %vm649, %v641
      %651 = vst.msk [vmem:[%s245 + $0x4] sm:$0xf] %vm649, %v642
      %652 = vst.msk [vmem:[%s245 + $0x8] sm:$0xf] %vm649, %v643
      %653 = vst.msk [vmem:[%s245 + $0xc] sm:$0xf] %vm649, %v644
      %654 = vst.msk [vmem:[%s245 + $0x10] sm:$0xf] %vm649, %v645
      %655 = vst.msk [vmem:[%s245 + $0x14] sm:$0xf] %vm649, %v646
      %656 = vst.msk [vmem:[%s245 + $0x18] sm:$0xf] %vm649, %v647
      %657 = vst.msk [vmem:[%s245 + $0x1c] sm:$0xf] %vm649, %v648
      %v658 = vsel %vm550, 1e+30, %v347
      %v659 = vsel %vm551, 1e+30, %v348
      %v660 = vsel %vm552, 1e+30, %v349
      %v661 = vsel %vm553, 1e+30, %v350
      %v662 = vsel %vm554, 1e+30, %v351
      %v663 = vsel %vm555, 1e+30, %v352
      %v664 = vsel %vm556, 1e+30, %v353
      %v665 = vsel %vm557, 1e+30, %v354
      %v666 = vsel %vm381, %v658, inf
      %667 = vmin.xlane.f32.xlu0 %v666
      %v668 = vpop.xlane.xlu0 %667
      %v669 = vsel %vm381, %v659, inf
      %670 = vmin.xlane.f32.xlu0 %v669
      %v671 = vpop.xlane.xlu0 %670
      %v672 = vsel %vm381, %v660, inf
      %673 = vmin.xlane.f32.xlu0 %v672
      %v674 = vpop.xlane.xlu0 %673
      %v675 = vsel %vm381, %v661, inf
      %676 = vmin.xlane.f32.xlu0 %v675
      %v677 = vpop.xlane.xlu0 %676
      %v678 = vsel %vm381, %v662, inf
      %679 = vmin.xlane.f32.xlu0 %v678
      %v680 = vpop.xlane.xlu0 %679
      %v681 = vsel %vm381, %v663, inf
      %682 = vmin.xlane.f32.xlu0 %v681
      %v683 = vpop.xlane.xlu0 %682
      %v684 = vsel %vm381, %v664, inf
      %685 = vmin.xlane.f32.xlu0 %v684
      %v686 = vpop.xlane.xlu0 %685
      %v687 = vsel %vm381, %v665, inf
      %688 = vmin.xlane.f32.xlu0 %v687
      %v689 = vpop.xlane.xlu0 %688
      %vm690 = vcmp.le.f32.partialorder %v658, %v668
      %vm691 = vcmp.le.f32.partialorder %v659, %v671
      %vm692 = vcmp.le.f32.partialorder %v660, %v674
      %vm693 = vcmp.le.f32.partialorder %v661, %v677
      %vm694 = vcmp.le.f32.partialorder %v662, %v680
      %vm695 = vcmp.le.f32.partialorder %v663, %v683
      %vm696 = vcmp.le.f32.partialorder %v664, %v686
      %vm697 = vcmp.le.f32.partialorder %v665, %v689
      %v698 = vsel %vm690, %v356, 16
      %v699 = vsel %vm691, %v356, 16
      %v700 = vsel %vm692, %v356, 16
      %v701 = vsel %vm693, %v356, 16
      %v702 = vsel %vm694, %v356, 16
      %v703 = vsel %vm695, %v356, 16
      %v704 = vsel %vm696, %v356, 16
      %v705 = vsel %vm697, %v356, 16
      %v706 = vsel %vm381, %v698, 2147483647
      %v707 = vand.u32 %v706, 65535
      %v708 = vshra.s32 %v706, 16
      %v709 = vcvt.s32.f32 %v707
      %v710 = vcvt.s32.f32 %v708
      %711 = vmin.xlane.f32.xlu0 %v710
      %v712 = vpop.xlane.xlu0 %711
      %vm713 = vcmp.eq.f32.partialorder %v710, %v712
      %v714 = vsel %vm713, %v709, inf
      %715 = vmin.xlane.f32.xlu0 %v714
      %v716 = vpop.xlane.xlu0 %715
      %v717 = vcvt.f32.s32 %v716
      %v718 = vcvt.f32.s32 %v712
      %v719 = vshll.u32 %v718, 16
      %v720 = vadd.s32 %v719, %v717
      %v721 = vsel %vm381, %v699, 2147483647
      %v722 = vand.u32 %v721, 65535
      %v723 = vshra.s32 %v721, 16
      %v724 = vcvt.s32.f32 %v722
      %v725 = vcvt.s32.f32 %v723
      %726 = vmin.xlane.f32.xlu0 %v725
      %v727 = vpop.xlane.xlu0 %726
      %vm728 = vcmp.eq.f32.partialorder %v725, %v727
      %v729 = vsel %vm728, %v724, inf
      %730 = vmin.xlane.f32.xlu0 %v729
      %v731 = vpop.xlane.xlu0 %730
      %v732 = vcvt.f32.s32 %v731
      %v733 = vcvt.f32.s32 %v727
      %v734 = vshll.u32 %v733, 16
      %v735 = vadd.s32 %v734, %v732
      %v736 = vsel %vm381, %v700, 2147483647
      %v737 = vand.u32 %v736, 65535
      %v738 = vshra.s32 %v736, 16
      %v739 = vcvt.s32.f32 %v737
      %v740 = vcvt.s32.f32 %v738
      %741 = vmin.xlane.f32.xlu0 %v740
      %v742 = vpop.xlane.xlu0 %741
      %vm743 = vcmp.eq.f32.partialorder %v740, %v742
      %v744 = vsel %vm743, %v739, inf
      %745 = vmin.xlane.f32.xlu0 %v744
      %v746 = vpop.xlane.xlu0 %745
      %v747 = vcvt.f32.s32 %v746
      %v748 = vcvt.f32.s32 %v742
      %v749 = vshll.u32 %v748, 16
      %v750 = vadd.s32 %v749, %v747
      %v751 = vsel %vm381, %v701, 2147483647
      %v752 = vand.u32 %v751, 65535
      %v753 = vshra.s32 %v751, 16
      %v754 = vcvt.s32.f32 %v752
      %v755 = vcvt.s32.f32 %v753
      %756 = vmin.xlane.f32.xlu0 %v755
      %v757 = vpop.xlane.xlu0 %756
      %vm758 = vcmp.eq.f32.partialorder %v755, %v757
      %v759 = vsel %vm758, %v754, inf
      %760 = vmin.xlane.f32.xlu0 %v759
      %v761 = vpop.xlane.xlu0 %760
      %v762 = vcvt.f32.s32 %v761
      %v763 = vcvt.f32.s32 %v757
      %v764 = vshll.u32 %v763, 16
      %v765 = vadd.s32 %v764, %v762
      %v766 = vsel %vm381, %v702, 2147483647
      %v767 = vand.u32 %v766, 65535
      %v768 = vshra.s32 %v766, 16
      %v769 = vcvt.s32.f32 %v767
      %v770 = vcvt.s32.f32 %v768
      %771 = vmin.xlane.f32.xlu0 %v770
      %v772 = vpop.xlane.xlu0 %771
      %vm773 = vcmp.eq.f32.partialorder %v770, %v772
      %v774 = vsel %vm773, %v769, inf
      %775 = vmin.xlane.f32.xlu0 %v774
      %v776 = vpop.xlane.xlu0 %775
      %v777 = vcvt.f32.s32 %v776
      %v778 = vcvt.f32.s32 %v772
      %v779 = vshll.u32 %v778, 16
      %v780 = vadd.s32 %v779, %v777
      %v781 = vsel %vm381, %v703, 2147483647
      %v782 = vand.u32 %v781, 65535
      %v783 = vshra.s32 %v781, 16
      %v784 = vcvt.s32.f32 %v782
      %v785 = vcvt.s32.f32 %v783
      %786 = vmin.xlane.f32.xlu0 %v785
      %v787 = vpop.xlane.xlu0 %786
      %vm788 = vcmp.eq.f32.partialorder %v785, %v787
      %v789 = vsel %vm788, %v784, inf
      %790 = vmin.xlane.f32.xlu0 %v789
      %v791 = vpop.xlane.xlu0 %790
      %v792 = vcvt.f32.s32 %v791
      %v793 = vcvt.f32.s32 %v787
      %v794 = vshll.u32 %v793, 16
      %v795 = vadd.s32 %v794, %v792
      %v796 = vsel %vm381, %v704, 2147483647
      %v797 = vand.u32 %v796, 65535
      %v798 = vshra.s32 %v796, 16
      %v799 = vcvt.s32.f32 %v797
      %v800 = vcvt.s32.f32 %v798
      %801 = vmin.xlane.f32.xlu0 %v800
      %v802 = vpop.xlane.xlu0 %801
      %vm803 = vcmp.eq.f32.partialorder %v800, %v802
      %v804 = vsel %vm803, %v799, inf
      %805 = vmin.xlane.f32.xlu0 %v804
      %v806 = vpop.xlane.xlu0 %805
      %v807 = vcvt.f32.s32 %v806
      %v808 = vcvt.f32.s32 %v802
      %v809 = vshll.u32 %v808, 16
      %v810 = vadd.s32 %v809, %v807
      %v811 = vsel %vm381, %v705, 2147483647
      %v812 = vand.u32 %v811, 65535
      %v813 = vshra.s32 %v811, 16
      %v814 = vcvt.s32.f32 %v812
      %v815 = vcvt.s32.f32 %v813
      %816 = vmin.xlane.f32.xlu0 %v815
      %v817 = vpop.xlane.xlu0 %816
      %vm818 = vcmp.eq.f32.partialorder %v815, %v817
      %v819 = vsel %vm818, %v814, inf
      %820 = vmin.xlane.f32.xlu0 %v819
      %v821 = vpop.xlane.xlu0 %820
      %v822 = vcvt.f32.s32 %v821
      %v823 = vcvt.f32.s32 %v817
      %v824 = vshll.u32 %v823, 16
      %v825 = vadd.s32 %v824, %v822
      %vm826 = vcmp.eq.s32.totalorder %v356, %v720
      %vm827 = vcmp.eq.s32.totalorder %v356, %v735
      %vm828 = vcmp.eq.s32.totalorder %v356, %v750
      %vm829 = vcmp.eq.s32.totalorder %v356, %v765
      %vm830 = vcmp.eq.s32.totalorder %v356, %v780
      %vm831 = vcmp.eq.s32.totalorder %v356, %v795
      %vm832 = vcmp.eq.s32.totalorder %v356, %v810
      %vm833 = vcmp.eq.s32.totalorder %v356, %v825
      %v834 = vsel %vm826, 1, 0
      %v835 = vsel %vm827, 1, 0
      %v836 = vsel %vm828, 1, 0
      %v837 = vsel %vm829, 1, 0
      %v838 = vsel %vm830, 1, 0
      %v839 = vsel %vm831, 1, 0
      %v840 = vsel %vm832, 1, 0
      %v841 = vsel %vm833, 1, 0
      %v842 = vcvt.s32.f32 %v834
      %v843 = vcvt.s32.f32 %v835
      %v844 = vcvt.s32.f32 %v836
      %v845 = vcvt.s32.f32 %v837
      %v846 = vcvt.s32.f32 %v838
      %v847 = vcvt.s32.f32 %v839
      %v848 = vcvt.s32.f32 %v840
      %v849 = vcvt.s32.f32 %v841
      %v850 = vpack.c.bf16 %v843, %v842
      %v851 = vpack.c.bf16 %v845, %v844
      %v852 = vpack.c.bf16 %v847, %v846
      %v853 = vpack.c.bf16 %v849, %v848
      %v855 = vsel %vm381, %v850, 0
      %v858 = vsel %vm381, %v851, 0
      %v861 = vsel %vm381, %v852, 0
      %v864 = vsel %vm381, %v853, 0
      %866 = vmatpush.bf16.xpose.msra.mxu0 0
      %867 = vmatpush.bf16.xpose.msra.mxu0 0
      %868 = vmatpush.bf16.xpose.msra.mxu0 0
      %869 = vmatpush.bf16.xpose.msra.mxu0 0
      %870 = vmatpush.bf16.xpose.msra.mxu0 0
      %871 = vmatpush.bf16.xpose.msra.mxu0 0
      %872 = vmatpush.bf16.xpose.msra.mxu0 %v602
      %873 = vmatpush.bf16.xpose.msra.mxu0 %v599
      %874 = vmatmul.bf16.gmra.mxu0 %v855
      %v875 = vpop.f32.mrf.mxu0
      %v876 = vadd.f32 0.0, %v875
      %v877 = vpop.f32.mrf.mxu0
      %v878 = vadd.f32 0.0, %v877
      %879 = vmatmul.bf16.gmra.mxu0 %v858
      %v880 = vpop.f32.mrf.mxu0
      %v881 = vadd.f32 0.0, %v880
      %v882 = vpop.f32.mrf.mxu0
      %v883 = vadd.f32 0.0, %v882
      %884 = vmatmul.bf16.gmra.mxu0 %v861
      %v885 = vpop.f32.mrf.mxu0
      %v886 = vadd.f32 0.0, %v885
      %v887 = vpop.f32.mrf.mxu0
      %v888 = vadd.f32 0.0, %v887
      %889 = vmatmul.bf16.gmra.mxu0 %v864
      %v890 = vpop.f32.mrf.mxu0
      %v891 = vadd.f32 0.0, %v890
      %v892 = vpop.f32.mrf.mxu0
      %v893 = vadd.f32 0.0, %v892
      %894 = vdwg.mxu0
      %v895 = vsub.f32 %v876, %v382
      %v896 = vsub.f32 %v878, %v383
      %v897 = vsub.f32 %v881, %v384
      %v898 = vsub.f32 %v883, %v385
      %v899 = vsub.f32 %v886, %v386
      %v900 = vsub.f32 %v888, %v387
      %v901 = vsub.f32 %v891, %v388
      %v902 = vsub.f32 %v893, %v389
      %v903 = vpack.c.bf16 %v895, %v895
      %v904 = vpack.c.bf16 %v896, %v896
      %v905 = vpack.c.bf16 %v897, %v897
      %v906 = vpack.c.bf16 %v898, %v898
      %v907 = vpack.c.bf16 %v899, %v899
      %v908 = vpack.c.bf16 %v900, %v900
      %v909 = vpack.c.bf16 %v901, %v901
      %v910 = vpack.c.bf16 %v902, %v902
      %s911 = scalar_lea.vmem %s245, 32
      %912 = vst.msk [vmem:[%s911] sm:$0xf] %vm649, %v903
      %913 = vst.msk [vmem:[%s911 + $0x4] sm:$0xf] %vm649, %v904
      %914 = vst.msk [vmem:[%s911 + $0x8] sm:$0xf] %vm649, %v905
      %915 = vst.msk [vmem:[%s911 + $0xc] sm:$0xf] %vm649, %v906
      %916 = vst.msk [vmem:[%s911 + $0x10] sm:$0xf] %vm649, %v907
      %917 = vst.msk [vmem:[%s911 + $0x14] sm:$0xf] %vm649, %v908
      %918 = vst.msk [vmem:[%s911 + $0x18] sm:$0xf] %vm649, %v909
      %919 = vst.msk [vmem:[%s911 + $0x1c] sm:$0xf] %vm649, %v910
      %v920 = vsel %vm826, 1e+30, %v658
      %v921 = vsel %vm827, 1e+30, %v659
      %v922 = vsel %vm828, 1e+30, %v660
      %v923 = vsel %vm829, 1e+30, %v661
      %v924 = vsel %vm830, 1e+30, %v662
      %v925 = vsel %vm831, 1e+30, %v663
      %v926 = vsel %vm832, 1e+30, %v664
      %v927 = vsel %vm833, 1e+30, %v665
      %v928 = vsel %vm381, %v920, inf
      %929 = vmin.xlane.f32.xlu0 %v928
      %v930 = vpop.xlane.xlu0 %929
      %v931 = vsel %vm381, %v921, inf
      %932 = vmin.xlane.f32.xlu0 %v931
      %v933 = vpop.xlane.xlu0 %932
      %v934 = vsel %vm381, %v922, inf
      %935 = vmin.xlane.f32.xlu0 %v934
      %v936 = vpop.xlane.xlu0 %935
      %v937 = vsel %vm381, %v923, inf
      %938 = vmin.xlane.f32.xlu0 %v937
      %v939 = vpop.xlane.xlu0 %938
      %v940 = vsel %vm381, %v924, inf
      %941 = vmin.xlane.f32.xlu0 %v940
      %v942 = vpop.xlane.xlu0 %941
      %v943 = vsel %vm381, %v925, inf
      %944 = vmin.xlane.f32.xlu0 %v943
      %v945 = vpop.xlane.xlu0 %944
      %v946 = vsel %vm381, %v926, inf
      %947 = vmin.xlane.f32.xlu0 %v946
      %v948 = vpop.xlane.xlu0 %947
      %v949 = vsel %vm381, %v927, inf
      %950 = vmin.xlane.f32.xlu0 %v949
      %v951 = vpop.xlane.xlu0 %950
      %vm952 = vcmp.le.f32.partialorder %v920, %v930
      %vm953 = vcmp.le.f32.partialorder %v921, %v933
      %vm954 = vcmp.le.f32.partialorder %v922, %v936
      %vm955 = vcmp.le.f32.partialorder %v923, %v939
      %vm956 = vcmp.le.f32.partialorder %v924, %v942
      %vm957 = vcmp.le.f32.partialorder %v925, %v945
      %vm958 = vcmp.le.f32.partialorder %v926, %v948
      %vm959 = vcmp.le.f32.partialorder %v927, %v951
      %v960 = vsel %vm952, %v356, 16
      %v961 = vsel %vm953, %v356, 16
      %v962 = vsel %vm954, %v356, 16
      %v963 = vsel %vm955, %v356, 16
      %v964 = vsel %vm956, %v356, 16
      %v965 = vsel %vm957, %v356, 16
      %v966 = vsel %vm958, %v356, 16
      %v967 = vsel %vm959, %v356, 16
      %v968 = vsel %vm381, %v960, 2147483647
      %v969 = vand.u32 %v968, 65535
      %v970 = vshra.s32 %v968, 16
      %v971 = vcvt.s32.f32 %v969
      %v972 = vcvt.s32.f32 %v970
      %973 = vmin.xlane.f32.xlu0 %v972
      %v974 = vpop.xlane.xlu0 %973
      %vm975 = vcmp.eq.f32.partialorder %v972, %v974
      %v976 = vsel %vm975, %v971, inf
      %977 = vmin.xlane.f32.xlu0 %v976
      %v978 = vpop.xlane.xlu0 %977
      %v979 = vcvt.f32.s32 %v978
      %v980 = vcvt.f32.s32 %v974
      %v981 = vshll.u32 %v980, 16
      %v982 = vadd.s32 %v981, %v979
      %v983 = vsel %vm381, %v961, 2147483647
      %v984 = vand.u32 %v983, 65535
      %v985 = vshra.s32 %v983, 16
      %v986 = vcvt.s32.f32 %v984
      %v987 = vcvt.s32.f32 %v985
      %988 = vmin.xlane.f32.xlu0 %v987
      %v989 = vpop.xlane.xlu0 %988
      %vm990 = vcmp.eq.f32.partialorder %v987, %v989
      %v991 = vsel %vm990, %v986, inf
      %992 = vmin.xlane.f32.xlu0 %v991
      %v993 = vpop.xlane.xlu0 %992
      %v994 = vcvt.f32.s32 %v993
      %v995 = vcvt.f32.s32 %v989
      %v996 = vshll.u32 %v995, 16
      %v997 = vadd.s32 %v996, %v994
      %v998 = vsel %vm381, %v962, 2147483647
      %v999 = vand.u32 %v998, 65535
      %v1000 = vshra.s32 %v998, 16
      %v1001 = vcvt.s32.f32 %v999
      %v1002 = vcvt.s32.f32 %v1000
      %1003 = vmin.xlane.f32.xlu0 %v1002
      %v1004 = vpop.xlane.xlu0 %1003
      %vm1005 = vcmp.eq.f32.partialorder %v1002, %v1004
      %v1006 = vsel %vm1005, %v1001, inf
      %1007 = vmin.xlane.f32.xlu0 %v1006
      %v1008 = vpop.xlane.xlu0 %1007
      %v1009 = vcvt.f32.s32 %v1008
      %v1010 = vcvt.f32.s32 %v1004
      %v1011 = vshll.u32 %v1010, 16
      %v1012 = vadd.s32 %v1011, %v1009
      %v1013 = vsel %vm381, %v963, 2147483647
      %v1014 = vand.u32 %v1013, 65535
      %v1015 = vshra.s32 %v1013, 16
      %v1016 = vcvt.s32.f32 %v1014
      %v1017 = vcvt.s32.f32 %v1015
      %1018 = vmin.xlane.f32.xlu0 %v1017
      %v1019 = vpop.xlane.xlu0 %1018
      %vm1020 = vcmp.eq.f32.partialorder %v1017, %v1019
      %v1021 = vsel %vm1020, %v1016, inf
      %1022 = vmin.xlane.f32.xlu0 %v1021
      %v1023 = vpop.xlane.xlu0 %1022
      %v1024 = vcvt.f32.s32 %v1023
      %v1025 = vcvt.f32.s32 %v1019
      %v1026 = vshll.u32 %v1025, 16
      %v1027 = vadd.s32 %v1026, %v1024
      %v1028 = vsel %vm381, %v964, 2147483647
      %v1029 = vand.u32 %v1028, 65535
      %v1030 = vshra.s32 %v1028, 16
      %v1031 = vcvt.s32.f32 %v1029
      %v1032 = vcvt.s32.f32 %v1030
      %1033 = vmin.xlane.f32.xlu0 %v1032
      %v1034 = vpop.xlane.xlu0 %1033
      %vm1035 = vcmp.eq.f32.partialorder %v1032, %v1034
      %v1036 = vsel %vm1035, %v1031, inf
      %1037 = vmin.xlane.f32.xlu0 %v1036
      %v1038 = vpop.xlane.xlu0 %1037
      %v1039 = vcvt.f32.s32 %v1038
      %v1040 = vcvt.f32.s32 %v1034
      %v1041 = vshll.u32 %v1040, 16
      %v1042 = vadd.s32 %v1041, %v1039
      %v1043 = vsel %vm381, %v965, 2147483647
      %v1044 = vand.u32 %v1043, 65535
      %v1045 = vshra.s32 %v1043, 16
      %v1046 = vcvt.s32.f32 %v1044
      %v1047 = vcvt.s32.f32 %v1045
      %1048 = vmin.xlane.f32.xlu0 %v1047
      %v1049 = vpop.xlane.xlu0 %1048
      %vm1050 = vcmp.eq.f32.partialorder %v1047, %v1049
      %v1051 = vsel %vm1050, %v1046, inf
      %1052 = vmin.xlane.f32.xlu0 %v1051
      %v1053 = vpop.xlane.xlu0 %1052
      %v1054 = vcvt.f32.s32 %v1053
      %v1055 = vcvt.f32.s32 %v1049
      %v1056 = vshll.u32 %v1055, 16
      %v1057 = vadd.s32 %v1056, %v1054
      %v1058 = vsel %vm381, %v966, 2147483647
      %v1059 = vand.u32 %v1058, 65535
      %v1060 = vshra.s32 %v1058, 16
      %v1061 = vcvt.s32.f32 %v1059
      %v1062 = vcvt.s32.f32 %v1060
      %1063 = vmin.xlane.f32.xlu0 %v1062
      %v1064 = vpop.xlane.xlu0 %1063
      %vm1065 = vcmp.eq.f32.partialorder %v1062, %v1064
      %v1066 = vsel %vm1065, %v1061, inf
      %1067 = vmin.xlane.f32.xlu0 %v1066
      %v1068 = vpop.xlane.xlu0 %1067
      %v1069 = vcvt.f32.s32 %v1068
      %v1070 = vcvt.f32.s32 %v1064
      %v1071 = vshll.u32 %v1070, 16
      %v1072 = vadd.s32 %v1071, %v1069
      %v1073 = vsel %vm381, %v967, 2147483647
      %v1074 = vand.u32 %v1073, 65535
      %v1075 = vshra.s32 %v1073, 16
      %v1076 = vcvt.s32.f32 %v1074
      %v1077 = vcvt.s32.f32 %v1075
      %1078 = vmin.xlane.f32.xlu0 %v1077
      %v1079 = vpop.xlane.xlu0 %1078
      %vm1080 = vcmp.eq.f32.partialorder %v1077, %v1079
      %v1081 = vsel %vm1080, %v1076, inf
      %1082 = vmin.xlane.f32.xlu0 %v1081
      %v1083 = vpop.xlane.xlu0 %1082
      %v1084 = vcvt.f32.s32 %v1083
      %v1085 = vcvt.f32.s32 %v1079
      %v1086 = vshll.u32 %v1085, 16
      %v1087 = vadd.s32 %v1086, %v1084
      %vm1088 = vcmp.eq.s32.totalorder %v356, %v982
      %vm1089 = vcmp.eq.s32.totalorder %v356, %v997
      %vm1090 = vcmp.eq.s32.totalorder %v356, %v1012
      %vm1091 = vcmp.eq.s32.totalorder %v356, %v1027
      %vm1092 = vcmp.eq.s32.totalorder %v356, %v1042
      %vm1093 = vcmp.eq.s32.totalorder %v356, %v1057
      %vm1094 = vcmp.eq.s32.totalorder %v356, %v1072
      %vm1095 = vcmp.eq.s32.totalorder %v356, %v1087
      %v1096 = vsel %vm1088, 1, 0
      %v1097 = vsel %vm1089, 1, 0
      %v1098 = vsel %vm1090, 1, 0
      %v1099 = vsel %vm1091, 1, 0
      %v1100 = vsel %vm1092, 1, 0
      %v1101 = vsel %vm1093, 1, 0
      %v1102 = vsel %vm1094, 1, 0
      %v1103 = vsel %vm1095, 1, 0
      %v1104 = vcvt.s32.f32 %v1096
      %v1105 = vcvt.s32.f32 %v1097
      %v1106 = vcvt.s32.f32 %v1098
      %v1107 = vcvt.s32.f32 %v1099
      %v1108 = vcvt.s32.f32 %v1100
      %v1109 = vcvt.s32.f32 %v1101
      %v1110 = vcvt.s32.f32 %v1102
      %v1111 = vcvt.s32.f32 %v1103
      %v1112 = vpack.c.bf16 %v1105, %v1104
      %v1113 = vpack.c.bf16 %v1107, %v1106
      %v1114 = vpack.c.bf16 %v1109, %v1108
      %v1115 = vpack.c.bf16 %v1111, %v1110
      %v1117 = vsel %vm381, %v1112, 0
      %v1120 = vsel %vm381, %v1113, 0
      %v1123 = vsel %vm381, %v1114, 0
      %v1126 = vsel %vm381, %v1115, 0
      %1128 = vmatpush.bf16.xpose.msra.mxu0 0
      %1129 = vmatpush.bf16.xpose.msra.mxu0 0
      %1130 = vmatpush.bf16.xpose.msra.mxu0 0
      %1131 = vmatpush.bf16.xpose.msra.mxu0 0
      %1132 = vmatpush.bf16.xpose.msra.mxu0 0
      %1133 = vmatpush.bf16.xpose.msra.mxu0 0
      %1134 = vmatpush.bf16.xpose.msra.mxu0 %v602
      %1135 = vmatpush.bf16.xpose.msra.mxu0 %v599
      %1136 = vmatmul.bf16.gmra.mxu0 %v1117
      %v1137 = vpop.f32.mrf.mxu0
      %v1138 = vadd.f32 0.0, %v1137
      %v1139 = vpop.f32.mrf.mxu0
      %v1140 = vadd.f32 0.0, %v1139
      %1141 = vmatmul.bf16.gmra.mxu0 %v1120
      %v1142 = vpop.f32.mrf.mxu0
      %v1143 = vadd.f32 0.0, %v1142
      %v1144 = vpop.f32.mrf.mxu0
      %v1145 = vadd.f32 0.0, %v1144
      %1146 = vmatmul.bf16.gmra.mxu0 %v1123
      %v1147 = vpop.f32.mrf.mxu0
      %v1148 = vadd.f32 0.0, %v1147
      %v1149 = vpop.f32.mrf.mxu0
      %v1150 = vadd.f32 0.0, %v1149
      %1151 = vmatmul.bf16.gmra.mxu0 %v1126
      %v1152 = vpop.f32.mrf.mxu0
      %v1153 = vadd.f32 0.0, %v1152
      %v1154 = vpop.f32.mrf.mxu0
      %v1155 = vadd.f32 0.0, %v1154
      %1156 = vdwg.mxu0
      %v1157 = vsub.f32 %v1138, %v382
      %v1158 = vsub.f32 %v1140, %v383
      %v1159 = vsub.f32 %v1143, %v384
      %v1160 = vsub.f32 %v1145, %v385
      %v1161 = vsub.f32 %v1148, %v386
      %v1162 = vsub.f32 %v1150, %v387
      %v1163 = vsub.f32 %v1153, %v388
      %v1164 = vsub.f32 %v1155, %v389
      %v1165 = vpack.c.bf16 %v1157, %v1157
      %v1166 = vpack.c.bf16 %v1158, %v1158
      %v1167 = vpack.c.bf16 %v1159, %v1159
      %v1168 = vpack.c.bf16 %v1160, %v1160
      %v1169 = vpack.c.bf16 %v1161, %v1161
      %v1170 = vpack.c.bf16 %v1162, %v1162
      %v1171 = vpack.c.bf16 %v1163, %v1163
      %v1172 = vpack.c.bf16 %v1164, %v1164
      %s1173 = scalar_lea.vmem %s245, 64
      %1174 = vst.msk [vmem:[%s1173] sm:$0xf] %vm649, %v1165
      %1175 = vst.msk [vmem:[%s1173 + $0x4] sm:$0xf] %vm649, %v1166
      %1176 = vst.msk [vmem:[%s1173 + $0x8] sm:$0xf] %vm649, %v1167
      %1177 = vst.msk [vmem:[%s1173 + $0xc] sm:$0xf] %vm649, %v1168
      %1178 = vst.msk [vmem:[%s1173 + $0x10] sm:$0xf] %vm649, %v1169
      %1179 = vst.msk [vmem:[%s1173 + $0x14] sm:$0xf] %vm649, %v1170
      %1180 = vst.msk [vmem:[%s1173 + $0x18] sm:$0xf] %vm649, %v1171
      %1181 = vst.msk [vmem:[%s1173 + $0x1c] sm:$0xf] %vm649, %v1172
      %v1182 = vsel %vm1088, 1e+30, %v920
      %v1183 = vsel %vm1089, 1e+30, %v921
      %v1184 = vsel %vm1090, 1e+30, %v922
      %v1185 = vsel %vm1091, 1e+30, %v923
      %v1186 = vsel %vm1092, 1e+30, %v924
      %v1187 = vsel %vm1093, 1e+30, %v925
      %v1188 = vsel %vm1094, 1e+30, %v926
      %v1189 = vsel %vm1095, 1e+30, %v927
      %v1190 = vsel %vm381, %v1182, inf
      %1191 = vmin.xlane.f32.xlu0 %v1190
      %v1192 = vpop.xlane.xlu0 %1191
      %v1193 = vsel %vm381, %v1183, inf
      %1194 = vmin.xlane.f32.xlu0 %v1193
      %v1195 = vpop.xlane.xlu0 %1194
      %v1196 = vsel %vm381, %v1184, inf
      %1197 = vmin.xlane.f32.xlu0 %v1196
      %v1198 = vpop.xlane.xlu0 %1197
      %v1199 = vsel %vm381, %v1185, inf
      %1200 = vmin.xlane.f32.xlu0 %v1199
      %v1201 = vpop.xlane.xlu0 %1200
      %v1202 = vsel %vm381, %v1186, inf
      %1203 = vmin.xlane.f32.xlu0 %v1202
      %v1204 = vpop.xlane.xlu0 %1203
      %v1205 = vsel %vm381, %v1187, inf
      %1206 = vmin.xlane.f32.xlu0 %v1205
      %v1207 = vpop.xlane.xlu0 %1206
      %v1208 = vsel %vm381, %v1188, inf
      %1209 = vmin.xlane.f32.xlu0 %v1208
      %v1210 = vpop.xlane.xlu0 %1209
      %v1211 = vsel %vm381, %v1189, inf
      %1212 = vmin.xlane.f32.xlu0 %v1211
      %v1213 = vpop.xlane.xlu0 %1212
      %vm1214 = vcmp.le.f32.partialorder %v1182, %v1192
      %vm1215 = vcmp.le.f32.partialorder %v1183, %v1195
      %vm1216 = vcmp.le.f32.partialorder %v1184, %v1198
      %vm1217 = vcmp.le.f32.partialorder %v1185, %v1201
      %vm1218 = vcmp.le.f32.partialorder %v1186, %v1204
      %vm1219 = vcmp.le.f32.partialorder %v1187, %v1207
      %vm1220 = vcmp.le.f32.partialorder %v1188, %v1210
      %vm1221 = vcmp.le.f32.partialorder %v1189, %v1213
      %v1222 = vsel %vm1214, %v356, 16
      %v1223 = vsel %vm1215, %v356, 16
      %v1224 = vsel %vm1216, %v356, 16
      %v1225 = vsel %vm1217, %v356, 16
      %v1226 = vsel %vm1218, %v356, 16
      %v1227 = vsel %vm1219, %v356, 16
      %v1228 = vsel %vm1220, %v356, 16
      %v1229 = vsel %vm1221, %v356, 16
      %v1230 = vsel %vm381, %v1222, 2147483647
      %v1231 = vand.u32 %v1230, 65535
      %v1232 = vshra.s32 %v1230, 16
      %v1233 = vcvt.s32.f32 %v1231
      %v1234 = vcvt.s32.f32 %v1232
      %1235 = vmin.xlane.f32.xlu0 %v1234
      %v1236 = vpop.xlane.xlu0 %1235
      %vm1237 = vcmp.eq.f32.partialorder %v1234, %v1236
      %v1238 = vsel %vm1237, %v1233, inf
      %1239 = vmin.xlane.f32.xlu0 %v1238
      %v1240 = vpop.xlane.xlu0 %1239
      %v1241 = vcvt.f32.s32 %v1240
      %v1242 = vcvt.f32.s32 %v1236
      %v1243 = vshll.u32 %v1242, 16
      %v1244 = vadd.s32 %v1243, %v1241
      %v1245 = vsel %vm381, %v1223, 2147483647
      %v1246 = vand.u32 %v1245, 65535
      %v1247 = vshra.s32 %v1245, 16
      %v1248 = vcvt.s32.f32 %v1246
      %v1249 = vcvt.s32.f32 %v1247
      %1250 = vmin.xlane.f32.xlu0 %v1249
      %v1251 = vpop.xlane.xlu0 %1250
      %vm1252 = vcmp.eq.f32.partialorder %v1249, %v1251
      %v1253 = vsel %vm1252, %v1248, inf
      %1254 = vmin.xlane.f32.xlu0 %v1253
      %v1255 = vpop.xlane.xlu0 %1254
      %v1256 = vcvt.f32.s32 %v1255
      %v1257 = vcvt.f32.s32 %v1251
      %v1258 = vshll.u32 %v1257, 16
      %v1259 = vadd.s32 %v1258, %v1256
      %v1260 = vsel %vm381, %v1224, 2147483647
      %v1261 = vand.u32 %v1260, 65535
      %v1262 = vshra.s32 %v1260, 16
      %v1263 = vcvt.s32.f32 %v1261
      %v1264 = vcvt.s32.f32 %v1262
      %1265 = vmin.xlane.f32.xlu0 %v1264
      %v1266 = vpop.xlane.xlu0 %1265
      %vm1267 = vcmp.eq.f32.partialorder %v1264, %v1266
      %v1268 = vsel %vm1267, %v1263, inf
      %1269 = vmin.xlane.f32.xlu0 %v1268
      %v1270 = vpop.xlane.xlu0 %1269
      %v1271 = vcvt.f32.s32 %v1270
      %v1272 = vcvt.f32.s32 %v1266
      %v1273 = vshll.u32 %v1272, 16
      %v1274 = vadd.s32 %v1273, %v1271
      %v1275 = vsel %vm381, %v1225, 2147483647
      %v1276 = vand.u32 %v1275, 65535
      %v1277 = vshra.s32 %v1275, 16
      %v1278 = vcvt.s32.f32 %v1276
      %v1279 = vcvt.s32.f32 %v1277
      %1280 = vmin.xlane.f32.xlu0 %v1279
      %v1281 = vpop.xlane.xlu0 %1280
      %vm1282 = vcmp.eq.f32.partialorder %v1279, %v1281
      %v1283 = vsel %vm1282, %v1278, inf
      %1284 = vmin.xlane.f32.xlu0 %v1283
      %v1285 = vpop.xlane.xlu0 %1284
      %v1286 = vcvt.f32.s32 %v1285
      %v1287 = vcvt.f32.s32 %v1281
      %v1288 = vshll.u32 %v1287, 16
      %v1289 = vadd.s32 %v1288, %v1286
      %v1290 = vsel %vm381, %v1226, 2147483647
      %v1291 = vand.u32 %v1290, 65535
      %v1292 = vshra.s32 %v1290, 16
      %v1293 = vcvt.s32.f32 %v1291
      %v1294 = vcvt.s32.f32 %v1292
      %1295 = vmin.xlane.f32.xlu0 %v1294
      %v1296 = vpop.xlane.xlu0 %1295
      %vm1297 = vcmp.eq.f32.partialorder %v1294, %v1296
      %v1298 = vsel %vm1297, %v1293, inf
      %1299 = vmin.xlane.f32.xlu0 %v1298
      %v1300 = vpop.xlane.xlu0 %1299
      %v1301 = vcvt.f32.s32 %v1300
      %v1302 = vcvt.f32.s32 %v1296
      %v1303 = vshll.u32 %v1302, 16
      %v1304 = vadd.s32 %v1303, %v1301
      %v1305 = vsel %vm381, %v1227, 2147483647
      %v1306 = vand.u32 %v1305, 65535
      %v1307 = vshra.s32 %v1305, 16
      %v1308 = vcvt.s32.f32 %v1306
      %v1309 = vcvt.s32.f32 %v1307
      %1310 = vmin.xlane.f32.xlu0 %v1309
      %v1311 = vpop.xlane.xlu0 %1310
      %vm1312 = vcmp.eq.f32.partialorder %v1309, %v1311
      %v1313 = vsel %vm1312, %v1308, inf
      %1314 = vmin.xlane.f32.xlu0 %v1313
      %v1315 = vpop.xlane.xlu0 %1314
      %v1316 = vcvt.f32.s32 %v1315
      %v1317 = vcvt.f32.s32 %v1311
      %v1318 = vshll.u32 %v1317, 16
      %v1319 = vadd.s32 %v1318, %v1316
      %v1320 = vsel %vm381, %v1228, 2147483647
      %v1321 = vand.u32 %v1320, 65535
      %v1322 = vshra.s32 %v1320, 16
      %v1323 = vcvt.s32.f32 %v1321
      %v1324 = vcvt.s32.f32 %v1322
      %1325 = vmin.xlane.f32.xlu0 %v1324
      %v1326 = vpop.xlane.xlu0 %1325
      %vm1327 = vcmp.eq.f32.partialorder %v1324, %v1326
      %v1328 = vsel %vm1327, %v1323, inf
      %1329 = vmin.xlane.f32.xlu0 %v1328
      %v1330 = vpop.xlane.xlu0 %1329
      %v1331 = vcvt.f32.s32 %v1330
      %v1332 = vcvt.f32.s32 %v1326
      %v1333 = vshll.u32 %v1332, 16
      %v1334 = vadd.s32 %v1333, %v1331
      %v1335 = vsel %vm381, %v1229, 2147483647
      %v1336 = vand.u32 %v1335, 65535
      %v1337 = vshra.s32 %v1335, 16
      %v1338 = vcvt.s32.f32 %v1336
      %v1339 = vcvt.s32.f32 %v1337
      %1340 = vmin.xlane.f32.xlu0 %v1339
      %v1341 = vpop.xlane.xlu0 %1340
      %vm1342 = vcmp.eq.f32.partialorder %v1339, %v1341
      %v1343 = vsel %vm1342, %v1338, inf
      %1344 = vmin.xlane.f32.xlu0 %v1343
      %v1345 = vpop.xlane.xlu0 %1344
      %v1346 = vcvt.f32.s32 %v1345
      %v1347 = vcvt.f32.s32 %v1341
      %v1348 = vshll.u32 %v1347, 16
      %v1349 = vadd.s32 %v1348, %v1346
      %vm1350 = vcmp.eq.s32.totalorder %v356, %v1244
      %vm1351 = vcmp.eq.s32.totalorder %v356, %v1259
      %vm1352 = vcmp.eq.s32.totalorder %v356, %v1274
      %vm1353 = vcmp.eq.s32.totalorder %v356, %v1289
      %vm1354 = vcmp.eq.s32.totalorder %v356, %v1304
      %vm1355 = vcmp.eq.s32.totalorder %v356, %v1319
      %vm1356 = vcmp.eq.s32.totalorder %v356, %v1334
      %vm1357 = vcmp.eq.s32.totalorder %v356, %v1349
      %v1358 = vsel %vm1350, 1, 0
      %v1359 = vsel %vm1351, 1, 0
      %v1360 = vsel %vm1352, 1, 0
      %v1361 = vsel %vm1353, 1, 0
      %v1362 = vsel %vm1354, 1, 0
      %v1363 = vsel %vm1355, 1, 0
      %v1364 = vsel %vm1356, 1, 0
      %v1365 = vsel %vm1357, 1, 0
      %v1366 = vcvt.s32.f32 %v1358
      %v1367 = vcvt.s32.f32 %v1359
      %v1368 = vcvt.s32.f32 %v1360
      %v1369 = vcvt.s32.f32 %v1361
      %v1370 = vcvt.s32.f32 %v1362
      %v1371 = vcvt.s32.f32 %v1363
      %v1372 = vcvt.s32.f32 %v1364
      %v1373 = vcvt.s32.f32 %v1365
      %v1374 = vpack.c.bf16 %v1367, %v1366
      %v1375 = vpack.c.bf16 %v1369, %v1368
      %v1376 = vpack.c.bf16 %v1371, %v1370
      %v1377 = vpack.c.bf16 %v1373, %v1372
      %v1379 = vsel %vm381, %v1374, 0
      %v1382 = vsel %vm381, %v1375, 0
      %v1385 = vsel %vm381, %v1376, 0
      %v1388 = vsel %vm381, %v1377, 0
      %1390 = vmatpush.bf16.xpose.msra.mxu0 0
      %1391 = vmatpush.bf16.xpose.msra.mxu0 0
      %1392 = vmatpush.bf16.xpose.msra.mxu0 0
      %1393 = vmatpush.bf16.xpose.msra.mxu0 0
      %1394 = vmatpush.bf16.xpose.msra.mxu0 0
      %1395 = vmatpush.bf16.xpose.msra.mxu0 0
      %1396 = vmatpush.bf16.xpose.msra.mxu0 %v602
      %1397 = vmatpush.bf16.xpose.msra.mxu0 %v599
      %1398 = vmatmul.bf16.gmra.mxu0 %v1379
      %v1399 = vpop.f32.mrf.mxu0
      %v1400 = vadd.f32 0.0, %v1399
      %v1401 = vpop.f32.mrf.mxu0
      %v1402 = vadd.f32 0.0, %v1401
      %1403 = vmatmul.bf16.gmra.mxu0 %v1382
      %v1404 = vpop.f32.mrf.mxu0
      %v1405 = vadd.f32 0.0, %v1404
      %v1406 = vpop.f32.mrf.mxu0
      %v1407 = vadd.f32 0.0, %v1406
      %1408 = vmatmul.bf16.gmra.mxu0 %v1385
      %v1409 = vpop.f32.mrf.mxu0
      %v1410 = vadd.f32 0.0, %v1409
      %v1411 = vpop.f32.mrf.mxu0
      %v1412 = vadd.f32 0.0, %v1411
      %1413 = vmatmul.bf16.gmra.mxu0 %v1388
      %v1414 = vpop.f32.mrf.mxu0
      %v1415 = vadd.f32 0.0, %v1414
      %v1416 = vpop.f32.mrf.mxu0
      %v1417 = vadd.f32 0.0, %v1416
      %1418 = vdwg.mxu0
      %v1419 = vsub.f32 %v1400, %v382
      %v1420 = vsub.f32 %v1402, %v383
      %v1421 = vsub.f32 %v1405, %v384
      %v1422 = vsub.f32 %v1407, %v385
      %v1423 = vsub.f32 %v1410, %v386
      %v1424 = vsub.f32 %v1412, %v387
      %v1425 = vsub.f32 %v1415, %v388
      %v1426 = vsub.f32 %v1417, %v389
      %v1427 = vpack.c.bf16 %v1419, %v1419
      %v1428 = vpack.c.bf16 %v1420, %v1420
      %v1429 = vpack.c.bf16 %v1421, %v1421
      %v1430 = vpack.c.bf16 %v1422, %v1422
      %v1431 = vpack.c.bf16 %v1423, %v1423
      %v1432 = vpack.c.bf16 %v1424, %v1424
      %v1433 = vpack.c.bf16 %v1425, %v1425
      %v1434 = vpack.c.bf16 %v1426, %v1426
      %s1435 = scalar_lea.vmem %s245, 96
      %1436 = vst.msk [vmem:[%s1435] sm:$0xf] %vm649, %v1427
      %1437 = vst.msk [vmem:[%s1435 + $0x4] sm:$0xf] %vm649, %v1428
      %1438 = vst.msk [vmem:[%s1435 + $0x8] sm:$0xf] %vm649, %v1429
      %1439 = vst.msk [vmem:[%s1435 + $0xc] sm:$0xf] %vm649, %v1430
      %1440 = vst.msk [vmem:[%s1435 + $0x10] sm:$0xf] %vm649, %v1431
      %1441 = vst.msk [vmem:[%s1435 + $0x14] sm:$0xf] %vm649, %v1432
      %1442 = vst.msk [vmem:[%s1435 + $0x18] sm:$0xf] %vm649, %v1433
      %1443 = vst.msk [vmem:[%s1435 + $0x1c] sm:$0xf] %vm649, %v1434
      %v1444 = vsel %vm1350, 1e+30, %v1182
      %v1445 = vsel %vm1351, 1e+30, %v1183
      %v1446 = vsel %vm1352, 1e+30, %v1184
      %v1447 = vsel %vm1353, 1e+30, %v1185
      %v1448 = vsel %vm1354, 1e+30, %v1186
      %v1449 = vsel %vm1355, 1e+30, %v1187
      %v1450 = vsel %vm1356, 1e+30, %v1188
      %v1451 = vsel %vm1357, 1e+30, %v1189
      %v1452 = vsel %vm381, %v1444, inf
      %1453 = vmin.xlane.f32.xlu0 %v1452
      %v1454 = vpop.xlane.xlu0 %1453
      %v1455 = vsel %vm381, %v1445, inf
      %1456 = vmin.xlane.f32.xlu0 %v1455
      %v1457 = vpop.xlane.xlu0 %1456
      %v1458 = vsel %vm381, %v1446, inf
      %1459 = vmin.xlane.f32.xlu0 %v1458
      %v1460 = vpop.xlane.xlu0 %1459
      %v1461 = vsel %vm381, %v1447, inf
      %1462 = vmin.xlane.f32.xlu0 %v1461
      %v1463 = vpop.xlane.xlu0 %1462
      %v1464 = vsel %vm381, %v1448, inf
      %1465 = vmin.xlane.f32.xlu0 %v1464
      %v1466 = vpop.xlane.xlu0 %1465
      %v1467 = vsel %vm381, %v1449, inf
      %1468 = vmin.xlane.f32.xlu0 %v1467
      %v1469 = vpop.xlane.xlu0 %1468
      %v1470 = vsel %vm381, %v1450, inf
      %1471 = vmin.xlane.f32.xlu0 %v1470
      %v1472 = vpop.xlane.xlu0 %1471
      %v1473 = vsel %vm381, %v1451, inf
      %1474 = vmin.xlane.f32.xlu0 %v1473
      %v1475 = vpop.xlane.xlu0 %1474
      %vm1476 = vcmp.le.f32.partialorder %v1444, %v1454
      %vm1477 = vcmp.le.f32.partialorder %v1445, %v1457
      %vm1478 = vcmp.le.f32.partialorder %v1446, %v1460
      %vm1479 = vcmp.le.f32.partialorder %v1447, %v1463
      %vm1480 = vcmp.le.f32.partialorder %v1448, %v1466
      %vm1481 = vcmp.le.f32.partialorder %v1449, %v1469
      %vm1482 = vcmp.le.f32.partialorder %v1450, %v1472
      %vm1483 = vcmp.le.f32.partialorder %v1451, %v1475
      %v1484 = vsel %vm1476, %v356, 16
      %v1485 = vsel %vm1477, %v356, 16
      %v1486 = vsel %vm1478, %v356, 16
      %v1487 = vsel %vm1479, %v356, 16
      %v1488 = vsel %vm1480, %v356, 16
      %v1489 = vsel %vm1481, %v356, 16
      %v1490 = vsel %vm1482, %v356, 16
      %v1491 = vsel %vm1483, %v356, 16
      %v1492 = vsel %vm381, %v1484, 2147483647
      %v1493 = vand.u32 %v1492, 65535
      %v1494 = vshra.s32 %v1492, 16
      %v1495 = vcvt.s32.f32 %v1493
      %v1496 = vcvt.s32.f32 %v1494
      %1497 = vmin.xlane.f32.xlu0 %v1496
      %v1498 = vpop.xlane.xlu0 %1497
      %vm1499 = vcmp.eq.f32.partialorder %v1496, %v1498
      %v1500 = vsel %vm1499, %v1495, inf
      %1501 = vmin.xlane.f32.xlu0 %v1500
      %v1502 = vpop.xlane.xlu0 %1501
      %v1503 = vcvt.f32.s32 %v1502
      %v1504 = vcvt.f32.s32 %v1498
      %v1505 = vshll.u32 %v1504, 16
      %v1506 = vadd.s32 %v1505, %v1503
      %v1507 = vsel %vm381, %v1485, 2147483647
      %v1508 = vand.u32 %v1507, 65535
      %v1509 = vshra.s32 %v1507, 16
      %v1510 = vcvt.s32.f32 %v1508
      %v1511 = vcvt.s32.f32 %v1509
      %1512 = vmin.xlane.f32.xlu0 %v1511
      %v1513 = vpop.xlane.xlu0 %1512
      %vm1514 = vcmp.eq.f32.partialorder %v1511, %v1513
      %v1515 = vsel %vm1514, %v1510, inf
      %1516 = vmin.xlane.f32.xlu0 %v1515
      %v1517 = vpop.xlane.xlu0 %1516
      %v1518 = vcvt.f32.s32 %v1517
      %v1519 = vcvt.f32.s32 %v1513
      %v1520 = vshll.u32 %v1519, 16
      %v1521 = vadd.s32 %v1520, %v1518
      %v1522 = vsel %vm381, %v1486, 2147483647
      %v1523 = vand.u32 %v1522, 65535
      %v1524 = vshra.s32 %v1522, 16
      %v1525 = vcvt.s32.f32 %v1523
      %v1526 = vcvt.s32.f32 %v1524
      %1527 = vmin.xlane.f32.xlu0 %v1526
      %v1528 = vpop.xlane.xlu0 %1527
      %vm1529 = vcmp.eq.f32.partialorder %v1526, %v1528
      %v1530 = vsel %vm1529, %v1525, inf
      %1531 = vmin.xlane.f32.xlu0 %v1530
      %v1532 = vpop.xlane.xlu0 %1531
      %v1533 = vcvt.f32.s32 %v1532
      %v1534 = vcvt.f32.s32 %v1528
      %v1535 = vshll.u32 %v1534, 16
      %v1536 = vadd.s32 %v1535, %v1533
      %v1537 = vsel %vm381, %v1487, 2147483647
      %v1538 = vand.u32 %v1537, 65535
      %v1539 = vshra.s32 %v1537, 16
      %v1540 = vcvt.s32.f32 %v1538
      %v1541 = vcvt.s32.f32 %v1539
      %1542 = vmin.xlane.f32.xlu0 %v1541
      %v1543 = vpop.xlane.xlu0 %1542
      %vm1544 = vcmp.eq.f32.partialorder %v1541, %v1543
      %v1545 = vsel %vm1544, %v1540, inf
      %1546 = vmin.xlane.f32.xlu0 %v1545
      %v1547 = vpop.xlane.xlu0 %1546
      %v1548 = vcvt.f32.s32 %v1547
      %v1549 = vcvt.f32.s32 %v1543
      %v1550 = vshll.u32 %v1549, 16
      %v1551 = vadd.s32 %v1550, %v1548
      %v1552 = vsel %vm381, %v1488, 2147483647
      %v1553 = vand.u32 %v1552, 65535
      %v1554 = vshra.s32 %v1552, 16
      %v1555 = vcvt.s32.f32 %v1553
      %v1556 = vcvt.s32.f32 %v1554
      %1557 = vmin.xlane.f32.xlu0 %v1556
      %v1558 = vpop.xlane.xlu0 %1557
      %vm1559 = vcmp.eq.f32.partialorder %v1556, %v1558
      %v1560 = vsel %vm1559, %v1555, inf
      %1561 = vmin.xlane.f32.xlu0 %v1560
      %v1562 = vpop.xlane.xlu0 %1561
      %v1563 = vcvt.f32.s32 %v1562
      %v1564 = vcvt.f32.s32 %v1558
      %v1565 = vshll.u32 %v1564, 16
      %v1566 = vadd.s32 %v1565, %v1563
      %v1567 = vsel %vm381, %v1489, 2147483647
      %v1568 = vand.u32 %v1567, 65535
      %v1569 = vshra.s32 %v1567, 16
      %v1570 = vcvt.s32.f32 %v1568
      %v1571 = vcvt.s32.f32 %v1569
      %1572 = vmin.xlane.f32.xlu0 %v1571
      %v1573 = vpop.xlane.xlu0 %1572
      %vm1574 = vcmp.eq.f32.partialorder %v1571, %v1573
      %v1575 = vsel %vm1574, %v1570, inf
      %1576 = vmin.xlane.f32.xlu0 %v1575
      %v1577 = vpop.xlane.xlu0 %1576
      %v1578 = vcvt.f32.s32 %v1577
      %v1579 = vcvt.f32.s32 %v1573
      %v1580 = vshll.u32 %v1579, 16
      %v1581 = vadd.s32 %v1580, %v1578
      %v1582 = vsel %vm381, %v1490, 2147483647
      %v1583 = vand.u32 %v1582, 65535
      %v1584 = vshra.s32 %v1582, 16
      %v1585 = vcvt.s32.f32 %v1583
      %v1586 = vcvt.s32.f32 %v1584
      %1587 = vmin.xlane.f32.xlu0 %v1586
      %v1588 = vpop.xlane.xlu0 %1587
      %vm1589 = vcmp.eq.f32.partialorder %v1586, %v1588
      %v1590 = vsel %vm1589, %v1585, inf
      %1591 = vmin.xlane.f32.xlu0 %v1590
      %v1592 = vpop.xlane.xlu0 %1591
      %v1593 = vcvt.f32.s32 %v1592
      %v1594 = vcvt.f32.s32 %v1588
      %v1595 = vshll.u32 %v1594, 16
      %v1596 = vadd.s32 %v1595, %v1593
      %v1597 = vsel %vm381, %v1491, 2147483647
      %v1598 = vand.u32 %v1597, 65535
      %v1599 = vshra.s32 %v1597, 16
      %v1600 = vcvt.s32.f32 %v1598
      %v1601 = vcvt.s32.f32 %v1599
      %1602 = vmin.xlane.f32.xlu0 %v1601
      %v1603 = vpop.xlane.xlu0 %1602
      %vm1604 = vcmp.eq.f32.partialorder %v1601, %v1603
      %v1605 = vsel %vm1604, %v1600, inf
      %1606 = vmin.xlane.f32.xlu0 %v1605
      %v1607 = vpop.xlane.xlu0 %1606
      %v1608 = vcvt.f32.s32 %v1607
      %v1609 = vcvt.f32.s32 %v1603
      %v1610 = vshll.u32 %v1609, 16
      %v1611 = vadd.s32 %v1610, %v1608
      %vm1612 = vcmp.eq.s32.totalorder %v356, %v1506
      %vm1613 = vcmp.eq.s32.totalorder %v356, %v1521
      %vm1614 = vcmp.eq.s32.totalorder %v356, %v1536
      %vm1615 = vcmp.eq.s32.totalorder %v356, %v1551
      %vm1616 = vcmp.eq.s32.totalorder %v356, %v1566
      %vm1617 = vcmp.eq.s32.totalorder %v356, %v1581
      %vm1618 = vcmp.eq.s32.totalorder %v356, %v1596
      %vm1619 = vcmp.eq.s32.totalorder %v356, %v1611
      %v1620 = vsel %vm1612, 1, 0
      %v1621 = vsel %vm1613, 1, 0
      %v1622 = vsel %vm1614, 1, 0
      %v1623 = vsel %vm1615, 1, 0
      %v1624 = vsel %vm1616, 1, 0
      %v1625 = vsel %vm1617, 1, 0
      %v1626 = vsel %vm1618, 1, 0
      %v1627 = vsel %vm1619, 1, 0
      %v1628 = vcvt.s32.f32 %v1620
      %v1629 = vcvt.s32.f32 %v1621
      %v1630 = vcvt.s32.f32 %v1622
      %v1631 = vcvt.s32.f32 %v1623
      %v1632 = vcvt.s32.f32 %v1624
      %v1633 = vcvt.s32.f32 %v1625
      %v1634 = vcvt.s32.f32 %v1626
      %v1635 = vcvt.s32.f32 %v1627
      %v1636 = vpack.c.bf16 %v1629, %v1628
      %v1637 = vpack.c.bf16 %v1631, %v1630
      %v1638 = vpack.c.bf16 %v1633, %v1632
      %v1639 = vpack.c.bf16 %v1635, %v1634
      %v1641 = vsel %vm381, %v1636, 0
      %v1644 = vsel %vm381, %v1637, 0
      %v1647 = vsel %vm381, %v1638, 0
      %v1650 = vsel %vm381, %v1639, 0
      %1652 = vmatpush.bf16.xpose.msra.mxu0 0
      %1653 = vmatpush.bf16.xpose.msra.mxu0 0
      %1654 = vmatpush.bf16.xpose.msra.mxu0 0
      %1655 = vmatpush.bf16.xpose.msra.mxu0 0
      %1656 = vmatpush.bf16.xpose.msra.mxu0 0
      %1657 = vmatpush.bf16.xpose.msra.mxu0 0
      %1658 = vmatpush.bf16.xpose.msra.mxu0 %v602
      %1659 = vmatpush.bf16.xpose.msra.mxu0 %v599
      %1660 = vmatmul.bf16.gmra.mxu0 %v1641
      %v1661 = vpop.f32.mrf.mxu0
      %v1662 = vadd.f32 0.0, %v1661
      %v1663 = vpop.f32.mrf.mxu0
      %v1664 = vadd.f32 0.0, %v1663
      %1665 = vmatmul.bf16.gmra.mxu0 %v1644
      %v1666 = vpop.f32.mrf.mxu0
      %v1667 = vadd.f32 0.0, %v1666
      %v1668 = vpop.f32.mrf.mxu0
      %v1669 = vadd.f32 0.0, %v1668
      %1670 = vmatmul.bf16.gmra.mxu0 %v1647
      %v1671 = vpop.f32.mrf.mxu0
      %v1672 = vadd.f32 0.0, %v1671
      %v1673 = vpop.f32.mrf.mxu0
      %v1674 = vadd.f32 0.0, %v1673
      %1675 = vmatmul.bf16.gmra.mxu0 %v1650
      %v1676 = vpop.f32.mrf.mxu0
      %v1677 = vadd.f32 0.0, %v1676
      %v1678 = vpop.f32.mrf.mxu0
      %v1679 = vadd.f32 0.0, %v1678
      %1680 = vdwg.mxu0
      %v1681 = vsub.f32 %v1662, %v382
      %v1682 = vsub.f32 %v1664, %v383
      %v1683 = vsub.f32 %v1667, %v384
      %v1684 = vsub.f32 %v1669, %v385
      %v1685 = vsub.f32 %v1672, %v386
      %v1686 = vsub.f32 %v1674, %v387
      %v1687 = vsub.f32 %v1677, %v388
      %v1688 = vsub.f32 %v1679, %v389
      %v1689 = vpack.c.bf16 %v1681, %v1681
      %v1690 = vpack.c.bf16 %v1682, %v1682
      %v1691 = vpack.c.bf16 %v1683, %v1683
      %v1692 = vpack.c.bf16 %v1684, %v1684
      %v1693 = vpack.c.bf16 %v1685, %v1685
      %v1694 = vpack.c.bf16 %v1686, %v1686
      %v1695 = vpack.c.bf16 %v1687, %v1687
      %v1696 = vpack.c.bf16 %v1688, %v1688
      %s1697 = scalar_lea.vmem %s245, 128
      %1698 = vst.msk [vmem:[%s1697] sm:$0xf] %vm649, %v1689
      %1699 = vst.msk [vmem:[%s1697 + $0x4] sm:$0xf] %vm649, %v1690
      %1700 = vst.msk [vmem:[%s1697 + $0x8] sm:$0xf] %vm649, %v1691
      %1701 = vst.msk [vmem:[%s1697 + $0xc] sm:$0xf] %vm649, %v1692
      %1702 = vst.msk [vmem:[%s1697 + $0x10] sm:$0xf] %vm649, %v1693
      %1703 = vst.msk [vmem:[%s1697 + $0x14] sm:$0xf] %vm649, %v1694
      %1704 = vst.msk [vmem:[%s1697 + $0x18] sm:$0xf] %vm649, %v1695
      %1705 = vst.msk [vmem:[%s1697 + $0x1c] sm:$0xf] %vm649, %v1696
      %v1706 = vsel %vm1612, 1e+30, %v1444
      %v1707 = vsel %vm1613, 1e+30, %v1445
      %v1708 = vsel %vm1614, 1e+30, %v1446
      %v1709 = vsel %vm1615, 1e+30, %v1447
      %v1710 = vsel %vm1616, 1e+30, %v1448
      %v1711 = vsel %vm1617, 1e+30, %v1449
      %v1712 = vsel %vm1618, 1e+30, %v1450
      %v1713 = vsel %vm1619, 1e+30, %v1451
      %v1714 = vsel %vm381, %v1706, inf
      %1715 = vmin.xlane.f32.xlu0 %v1714
      %v1716 = vpop.xlane.xlu0 %1715
      %v1717 = vsel %vm381, %v1707, inf
      %1718 = vmin.xlane.f32.xlu0 %v1717
      %v1719 = vpop.xlane.xlu0 %1718
      %v1720 = vsel %vm381, %v1708, inf
      %1721 = vmin.xlane.f32.xlu0 %v1720
      %v1722 = vpop.xlane.xlu0 %1721
      %v1723 = vsel %vm381, %v1709, inf
      %1724 = vmin.xlane.f32.xlu0 %v1723
      %v1725 = vpop.xlane.xlu0 %1724
      %v1726 = vsel %vm381, %v1710, inf
      %1727 = vmin.xlane.f32.xlu0 %v1726
      %v1728 = vpop.xlane.xlu0 %1727
      %v1729 = vsel %vm381, %v1711, inf
      %1730 = vmin.xlane.f32.xlu0 %v1729
      %v1731 = vpop.xlane.xlu0 %1730
      %v1732 = vsel %vm381, %v1712, inf
      %1733 = vmin.xlane.f32.xlu0 %v1732
      %v1734 = vpop.xlane.xlu0 %1733
      %v1735 = vsel %vm381, %v1713, inf
      %1736 = vmin.xlane.f32.xlu0 %v1735
      %v1737 = vpop.xlane.xlu0 %1736
      %vm1738 = vcmp.le.f32.partialorder %v1706, %v1716
      %vm1739 = vcmp.le.f32.partialorder %v1707, %v1719
      %vm1740 = vcmp.le.f32.partialorder %v1708, %v1722
      %vm1741 = vcmp.le.f32.partialorder %v1709, %v1725
      %vm1742 = vcmp.le.f32.partialorder %v1710, %v1728
      %vm1743 = vcmp.le.f32.partialorder %v1711, %v1731
      %vm1744 = vcmp.le.f32.partialorder %v1712, %v1734
      %vm1745 = vcmp.le.f32.partialorder %v1713, %v1737
      %v1746 = vsel %vm1738, %v356, 16
      %v1747 = vsel %vm1739, %v356, 16
      %v1748 = vsel %vm1740, %v356, 16
      %v1749 = vsel %vm1741, %v356, 16
      %v1750 = vsel %vm1742, %v356, 16
      %v1751 = vsel %vm1743, %v356, 16
      %v1752 = vsel %vm1744, %v356, 16
      %v1753 = vsel %vm1745, %v356, 16
      %v1754 = vsel %vm381, %v1746, 2147483647
      %v1755 = vand.u32 %v1754, 65535
      %v1756 = vshra.s32 %v1754, 16
      %v1757 = vcvt.s32.f32 %v1755
      %v1758 = vcvt.s32.f32 %v1756
      %1759 = vmin.xlane.f32.xlu0 %v1758
      %v1760 = vpop.xlane.xlu0 %1759
      %vm1761 = vcmp.eq.f32.partialorder %v1758, %v1760
      %v1762 = vsel %vm1761, %v1757, inf
      %1763 = vmin.xlane.f32.xlu0 %v1762
      %v1764 = vpop.xlane.xlu0 %1763
      %v1765 = vcvt.f32.s32 %v1764
      %v1766 = vcvt.f32.s32 %v1760
      %v1767 = vshll.u32 %v1766, 16
      %v1768 = vadd.s32 %v1767, %v1765
      %v1769 = vsel %vm381, %v1747, 2147483647
      %v1770 = vand.u32 %v1769, 65535
      %v1771 = vshra.s32 %v1769, 16
      %v1772 = vcvt.s32.f32 %v1770
      %v1773 = vcvt.s32.f32 %v1771
      %1774 = vmin.xlane.f32.xlu0 %v1773
      %v1775 = vpop.xlane.xlu0 %1774
      %vm1776 = vcmp.eq.f32.partialorder %v1773, %v1775
      %v1777 = vsel %vm1776, %v1772, inf
      %1778 = vmin.xlane.f32.xlu0 %v1777
      %v1779 = vpop.xlane.xlu0 %1778
      %v1780 = vcvt.f32.s32 %v1779
      %v1781 = vcvt.f32.s32 %v1775
      %v1782 = vshll.u32 %v1781, 16
      %v1783 = vadd.s32 %v1782, %v1780
      %v1784 = vsel %vm381, %v1748, 2147483647
      %v1785 = vand.u32 %v1784, 65535
      %v1786 = vshra.s32 %v1784, 16
      %v1787 = vcvt.s32.f32 %v1785
      %v1788 = vcvt.s32.f32 %v1786
      %1789 = vmin.xlane.f32.xlu0 %v1788
      %v1790 = vpop.xlane.xlu0 %1789
      %vm1791 = vcmp.eq.f32.partialorder %v1788, %v1790
      %v1792 = vsel %vm1791, %v1787, inf
      %1793 = vmin.xlane.f32.xlu0 %v1792
      %v1794 = vpop.xlane.xlu0 %1793
      %v1795 = vcvt.f32.s32 %v1794
      %v1796 = vcvt.f32.s32 %v1790
      %v1797 = vshll.u32 %v1796, 16
      %v1798 = vadd.s32 %v1797, %v1795
      %v1799 = vsel %vm381, %v1749, 2147483647
      %v1800 = vand.u32 %v1799, 65535
      %v1801 = vshra.s32 %v1799, 16
      %v1802 = vcvt.s32.f32 %v1800
      %v1803 = vcvt.s32.f32 %v1801
      %1804 = vmin.xlane.f32.xlu0 %v1803
      %v1805 = vpop.xlane.xlu0 %1804
      %vm1806 = vcmp.eq.f32.partialorder %v1803, %v1805
      %v1807 = vsel %vm1806, %v1802, inf
      %1808 = vmin.xlane.f32.xlu0 %v1807
      %v1809 = vpop.xlane.xlu0 %1808
      %v1810 = vcvt.f32.s32 %v1809
      %v1811 = vcvt.f32.s32 %v1805
      %v1812 = vshll.u32 %v1811, 16
      %v1813 = vadd.s32 %v1812, %v1810
      %v1814 = vsel %vm381, %v1750, 2147483647
      %v1815 = vand.u32 %v1814, 65535
      %v1816 = vshra.s32 %v1814, 16
      %v1817 = vcvt.s32.f32 %v1815
      %v1818 = vcvt.s32.f32 %v1816
      %1819 = vmin.xlane.f32.xlu0 %v1818
      %v1820 = vpop.xlane.xlu0 %1819
      %vm1821 = vcmp.eq.f32.partialorder %v1818, %v1820
      %v1822 = vsel %vm1821, %v1817, inf
      %1823 = vmin.xlane.f32.xlu0 %v1822
      %v1824 = vpop.xlane.xlu0 %1823
      %v1825 = vcvt.f32.s32 %v1824
      %v1826 = vcvt.f32.s32 %v1820
      %v1827 = vshll.u32 %v1826, 16
      %v1828 = vadd.s32 %v1827, %v1825
      %v1829 = vsel %vm381, %v1751, 2147483647
      %v1830 = vand.u32 %v1829, 65535
      %v1831 = vshra.s32 %v1829, 16
      %v1832 = vcvt.s32.f32 %v1830
      %v1833 = vcvt.s32.f32 %v1831
      %1834 = vmin.xlane.f32.xlu0 %v1833
      %v1835 = vpop.xlane.xlu0 %1834
      %vm1836 = vcmp.eq.f32.partialorder %v1833, %v1835
      %v1837 = vsel %vm1836, %v1832, inf
      %1838 = vmin.xlane.f32.xlu0 %v1837
      %v1839 = vpop.xlane.xlu0 %1838
      %v1840 = vcvt.f32.s32 %v1839
      %v1841 = vcvt.f32.s32 %v1835
      %v1842 = vshll.u32 %v1841, 16
      %v1843 = vadd.s32 %v1842, %v1840
      %v1844 = vsel %vm381, %v1752, 2147483647
      %v1845 = vand.u32 %v1844, 65535
      %v1846 = vshra.s32 %v1844, 16
      %v1847 = vcvt.s32.f32 %v1845
      %v1848 = vcvt.s32.f32 %v1846
      %1849 = vmin.xlane.f32.xlu0 %v1848
      %v1850 = vpop.xlane.xlu0 %1849
      %vm1851 = vcmp.eq.f32.partialorder %v1848, %v1850
      %v1852 = vsel %vm1851, %v1847, inf
      %1853 = vmin.xlane.f32.xlu0 %v1852
      %v1854 = vpop.xlane.xlu0 %1853
      %v1855 = vcvt.f32.s32 %v1854
      %v1856 = vcvt.f32.s32 %v1850
      %v1857 = vshll.u32 %v1856, 16
      %v1858 = vadd.s32 %v1857, %v1855
      %v1859 = vsel %vm381, %v1753, 2147483647
      %v1860 = vand.u32 %v1859, 65535
      %v1861 = vshra.s32 %v1859, 16
      %v1862 = vcvt.s32.f32 %v1860
      %v1863 = vcvt.s32.f32 %v1861
      %1864 = vmin.xlane.f32.xlu0 %v1863
      %v1865 = vpop.xlane.xlu0 %1864
      %vm1866 = vcmp.eq.f32.partialorder %v1863, %v1865
      %v1867 = vsel %vm1866, %v1862, inf
      %1868 = vmin.xlane.f32.xlu0 %v1867
      %v1869 = vpop.xlane.xlu0 %1868
      %v1870 = vcvt.f32.s32 %v1869
      %v1871 = vcvt.f32.s32 %v1865
      %v1872 = vshll.u32 %v1871, 16
      %v1873 = vadd.s32 %v1872, %v1870
      %vm1874 = vcmp.eq.s32.totalorder %v356, %v1768
      %vm1875 = vcmp.eq.s32.totalorder %v356, %v1783
      %vm1876 = vcmp.eq.s32.totalorder %v356, %v1798
      %vm1877 = vcmp.eq.s32.totalorder %v356, %v1813
      %vm1878 = vcmp.eq.s32.totalorder %v356, %v1828
      %vm1879 = vcmp.eq.s32.totalorder %v356, %v1843
      %vm1880 = vcmp.eq.s32.totalorder %v356, %v1858
      %vm1881 = vcmp.eq.s32.totalorder %v356, %v1873
      %v1882 = vsel %vm1874, 1, 0
      %v1883 = vsel %vm1875, 1, 0
      %v1884 = vsel %vm1876, 1, 0
      %v1885 = vsel %vm1877, 1, 0
      %v1886 = vsel %vm1878, 1, 0
      %v1887 = vsel %vm1879, 1, 0
      %v1888 = vsel %vm1880, 1, 0
      %v1889 = vsel %vm1881, 1, 0
      %v1890 = vcvt.s32.f32 %v1882
      %v1891 = vcvt.s32.f32 %v1883
      %v1892 = vcvt.s32.f32 %v1884
      %v1893 = vcvt.s32.f32 %v1885
      %v1894 = vcvt.s32.f32 %v1886
      %v1895 = vcvt.s32.f32 %v1887
      %v1896 = vcvt.s32.f32 %v1888
      %v1897 = vcvt.s32.f32 %v1889
      %v1898 = vpack.c.bf16 %v1891, %v1890
      %v1899 = vpack.c.bf16 %v1893, %v1892
      %v1900 = vpack.c.bf16 %v1895, %v1894
      %v1901 = vpack.c.bf16 %v1897, %v1896
      %v1903 = vsel %vm381, %v1898, 0
      %v1906 = vsel %vm381, %v1899, 0
      %v1909 = vsel %vm381, %v1900, 0
      %v1912 = vsel %vm381, %v1901, 0
      %1914 = vmatpush.bf16.xpose.msra.mxu0 0
      %1915 = vmatpush.bf16.xpose.msra.mxu0 0
      %1916 = vmatpush.bf16.xpose.msra.mxu0 0
      %1917 = vmatpush.bf16.xpose.msra.mxu0 0
      %1918 = vmatpush.bf16.xpose.msra.mxu0 0
      %1919 = vmatpush.bf16.xpose.msra.mxu0 0
      %1920 = vmatpush.bf16.xpose.msra.mxu0 %v602
      %1921 = vmatpush.bf16.xpose.msra.mxu0 %v599
      %1922 = vmatmul.bf16.gmra.mxu0 %v1903
      %v1923 = vpop.f32.mrf.mxu0
      %v1924 = vadd.f32 0.0, %v1923
      %v1925 = vpop.f32.mrf.mxu0
      %v1926 = vadd.f32 0.0, %v1925
      %1927 = vmatmul.bf16.gmra.mxu0 %v1906
      %v1928 = vpop.f32.mrf.mxu0
      %v1929 = vadd.f32 0.0, %v1928
      %v1930 = vpop.f32.mrf.mxu0
      %v1931 = vadd.f32 0.0, %v1930
      %1932 = vmatmul.bf16.gmra.mxu0 %v1909
      %v1933 = vpop.f32.mrf.mxu0
      %v1934 = vadd.f32 0.0, %v1933
      %v1935 = vpop.f32.mrf.mxu0
      %v1936 = vadd.f32 0.0, %v1935
      %1937 = vmatmul.bf16.gmra.mxu0 %v1912
      %v1938 = vpop.f32.mrf.mxu0
      %v1939 = vadd.f32 0.0, %v1938
      %v1940 = vpop.f32.mrf.mxu0
      %v1941 = vadd.f32 0.0, %v1940
      %1942 = vdwg.mxu0
      %v1943 = vsub.f32 %v1924, %v382
      %v1944 = vsub.f32 %v1926, %v383
      %v1945 = vsub.f32 %v1929, %v384
      %v1946 = vsub.f32 %v1931, %v385
      %v1947 = vsub.f32 %v1934, %v386
      %v1948 = vsub.f32 %v1936, %v387
      %v1949 = vsub.f32 %v1939, %v388
      %v1950 = vsub.f32 %v1941, %v389
      %v1951 = vpack.c.bf16 %v1943, %v1943
      %v1952 = vpack.c.bf16 %v1944, %v1944
      %v1953 = vpack.c.bf16 %v1945, %v1945
      %v1954 = vpack.c.bf16 %v1946, %v1946
      %v1955 = vpack.c.bf16 %v1947, %v1947
      %v1956 = vpack.c.bf16 %v1948, %v1948
      %v1957 = vpack.c.bf16 %v1949, %v1949
      %v1958 = vpack.c.bf16 %v1950, %v1950
      %s1959 = scalar_lea.vmem %s245, 160
      %1960 = vst.msk [vmem:[%s1959] sm:$0xf] %vm649, %v1951
      %1961 = vst.msk [vmem:[%s1959 + $0x4] sm:$0xf] %vm649, %v1952
      %1962 = vst.msk [vmem:[%s1959 + $0x8] sm:$0xf] %vm649, %v1953
      %1963 = vst.msk [vmem:[%s1959 + $0xc] sm:$0xf] %vm649, %v1954
      %1964 = vst.msk [vmem:[%s1959 + $0x10] sm:$0xf] %vm649, %v1955
      %1965 = vst.msk [vmem:[%s1959 + $0x14] sm:$0xf] %vm649, %v1956
      %1966 = vst.msk [vmem:[%s1959 + $0x18] sm:$0xf] %vm649, %v1957
      %1967 = vst.msk [vmem:[%s1959 + $0x1c] sm:$0xf] %vm649, %v1958
      %v1968 = vsel %vm1874, 1e+30, %v1706
      %v1969 = vsel %vm1875, 1e+30, %v1707
      %v1970 = vsel %vm1876, 1e+30, %v1708
      %v1971 = vsel %vm1877, 1e+30, %v1709
      %v1972 = vsel %vm1878, 1e+30, %v1710
      %v1973 = vsel %vm1879, 1e+30, %v1711
      %v1974 = vsel %vm1880, 1e+30, %v1712
      %v1975 = vsel %vm1881, 1e+30, %v1713
      %v1976 = vsel %vm381, %v1968, inf
      %1977 = vmin.xlane.f32.xlu0 %v1976
      %v1978 = vpop.xlane.xlu0 %1977
      %v1979 = vsel %vm381, %v1969, inf
      %1980 = vmin.xlane.f32.xlu0 %v1979
      %v1981 = vpop.xlane.xlu0 %1980
      %v1982 = vsel %vm381, %v1970, inf
      %1983 = vmin.xlane.f32.xlu0 %v1982
      %v1984 = vpop.xlane.xlu0 %1983
      %v1985 = vsel %vm381, %v1971, inf
      %1986 = vmin.xlane.f32.xlu0 %v1985
      %v1987 = vpop.xlane.xlu0 %1986
      %v1988 = vsel %vm381, %v1972, inf
      %1989 = vmin.xlane.f32.xlu0 %v1988
      %v1990 = vpop.xlane.xlu0 %1989
      %v1991 = vsel %vm381, %v1973, inf
      %1992 = vmin.xlane.f32.xlu0 %v1991
      %v1993 = vpop.xlane.xlu0 %1992
      %v1994 = vsel %vm381, %v1974, inf
      %1995 = vmin.xlane.f32.xlu0 %v1994
      %v1996 = vpop.xlane.xlu0 %1995
      %v1997 = vsel %vm381, %v1975, inf
      %1998 = vmin.xlane.f32.xlu0 %v1997
      %v1999 = vpop.xlane.xlu0 %1998
      %vm2000 = vcmp.le.f32.partialorder %v1968, %v1978
      %vm2001 = vcmp.le.f32.partialorder %v1969, %v1981
      %vm2002 = vcmp.le.f32.partialorder %v1970, %v1984
      %vm2003 = vcmp.le.f32.partialorder %v1971, %v1987
      %vm2004 = vcmp.le.f32.partialorder %v1972, %v1990
      %vm2005 = vcmp.le.f32.partialorder %v1973, %v1993
      %vm2006 = vcmp.le.f32.partialorder %v1974, %v1996
      %vm2007 = vcmp.le.f32.partialorder %v1975, %v1999
      %v2008 = vsel %vm2000, %v356, 16
      %v2009 = vsel %vm2001, %v356, 16
      %v2010 = vsel %vm2002, %v356, 16
      %v2011 = vsel %vm2003, %v356, 16
      %v2012 = vsel %vm2004, %v356, 16
      %v2013 = vsel %vm2005, %v356, 16
      %v2014 = vsel %vm2006, %v356, 16
      %v2015 = vsel %vm2007, %v356, 16
      %v2016 = vsel %vm381, %v2008, 2147483647
      %v2017 = vand.u32 %v2016, 65535
      %v2018 = vshra.s32 %v2016, 16
      %v2019 = vcvt.s32.f32 %v2017
      %v2020 = vcvt.s32.f32 %v2018
      %2021 = vmin.xlane.f32.xlu0 %v2020
      %v2022 = vpop.xlane.xlu0 %2021
      %vm2023 = vcmp.eq.f32.partialorder %v2020, %v2022
      %v2024 = vsel %vm2023, %v2019, inf
      %2025 = vmin.xlane.f32.xlu0 %v2024
      %v2026 = vpop.xlane.xlu0 %2025
      %v2027 = vcvt.f32.s32 %v2026
      %v2028 = vcvt.f32.s32 %v2022
      %v2029 = vshll.u32 %v2028, 16
      %v2030 = vadd.s32 %v2029, %v2027
      %v2031 = vsel %vm381, %v2009, 2147483647
      %v2032 = vand.u32 %v2031, 65535
      %v2033 = vshra.s32 %v2031, 16
      %v2034 = vcvt.s32.f32 %v2032
      %v2035 = vcvt.s32.f32 %v2033
      %2036 = vmin.xlane.f32.xlu0 %v2035
      %v2037 = vpop.xlane.xlu0 %2036
      %vm2038 = vcmp.eq.f32.partialorder %v2035, %v2037
      %v2039 = vsel %vm2038, %v2034, inf
      %2040 = vmin.xlane.f32.xlu0 %v2039
      %v2041 = vpop.xlane.xlu0 %2040
      %v2042 = vcvt.f32.s32 %v2041
      %v2043 = vcvt.f32.s32 %v2037
      %v2044 = vshll.u32 %v2043, 16
      %v2045 = vadd.s32 %v2044, %v2042
      %v2046 = vsel %vm381, %v2010, 2147483647
      %v2047 = vand.u32 %v2046, 65535
      %v2048 = vshra.s32 %v2046, 16
      %v2049 = vcvt.s32.f32 %v2047
      %v2050 = vcvt.s32.f32 %v2048
      %2051 = vmin.xlane.f32.xlu0 %v2050
      %v2052 = vpop.xlane.xlu0 %2051
      %vm2053 = vcmp.eq.f32.partialorder %v2050, %v2052
      %v2054 = vsel %vm2053, %v2049, inf
      %2055 = vmin.xlane.f32.xlu0 %v2054
      %v2056 = vpop.xlane.xlu0 %2055
      %v2057 = vcvt.f32.s32 %v2056
      %v2058 = vcvt.f32.s32 %v2052
      %v2059 = vshll.u32 %v2058, 16
      %v2060 = vadd.s32 %v2059, %v2057
      %v2061 = vsel %vm381, %v2011, 2147483647
      %v2062 = vand.u32 %v2061, 65535
      %v2063 = vshra.s32 %v2061, 16
      %v2064 = vcvt.s32.f32 %v2062
      %v2065 = vcvt.s32.f32 %v2063
      %2066 = vmin.xlane.f32.xlu0 %v2065
      %v2067 = vpop.xlane.xlu0 %2066
      %vm2068 = vcmp.eq.f32.partialorder %v2065, %v2067
      %v2069 = vsel %vm2068, %v2064, inf
      %2070 = vmin.xlane.f32.xlu0 %v2069
      %v2071 = vpop.xlane.xlu0 %2070
      %v2072 = vcvt.f32.s32 %v2071
      %v2073 = vcvt.f32.s32 %v2067
      %v2074 = vshll.u32 %v2073, 16
      %v2075 = vadd.s32 %v2074, %v2072
      %v2076 = vsel %vm381, %v2012, 2147483647
      %v2077 = vand.u32 %v2076, 65535
      %v2078 = vshra.s32 %v2076, 16
      %v2079 = vcvt.s32.f32 %v2077
      %v2080 = vcvt.s32.f32 %v2078
      %2081 = vmin.xlane.f32.xlu0 %v2080
      %v2082 = vpop.xlane.xlu0 %2081
      %vm2083 = vcmp.eq.f32.partialorder %v2080, %v2082
      %v2084 = vsel %vm2083, %v2079, inf
      %2085 = vmin.xlane.f32.xlu0 %v2084
      %v2086 = vpop.xlane.xlu0 %2085
      %v2087 = vcvt.f32.s32 %v2086
      %v2088 = vcvt.f32.s32 %v2082
      %v2089 = vshll.u32 %v2088, 16
      %v2090 = vadd.s32 %v2089, %v2087
      %v2091 = vsel %vm381, %v2013, 2147483647
      %v2092 = vand.u32 %v2091, 65535
      %v2093 = vshra.s32 %v2091, 16
      %v2094 = vcvt.s32.f32 %v2092
      %v2095 = vcvt.s32.f32 %v2093
      %2096 = vmin.xlane.f32.xlu0 %v2095
      %v2097 = vpop.xlane.xlu0 %2096
      %vm2098 = vcmp.eq.f32.partialorder %v2095, %v2097
      %v2099 = vsel %vm2098, %v2094, inf
      %2100 = vmin.xlane.f32.xlu0 %v2099
      %v2101 = vpop.xlane.xlu0 %2100
      %v2102 = vcvt.f32.s32 %v2101
      %v2103 = vcvt.f32.s32 %v2097
      %v2104 = vshll.u32 %v2103, 16
      %v2105 = vadd.s32 %v2104, %v2102
      %v2106 = vsel %vm381, %v2014, 2147483647
      %v2107 = vand.u32 %v2106, 65535
      %v2108 = vshra.s32 %v2106, 16
      %v2109 = vcvt.s32.f32 %v2107
      %v2110 = vcvt.s32.f32 %v2108
      %2111 = vmin.xlane.f32.xlu0 %v2110
      %v2112 = vpop.xlane.xlu0 %2111
      %vm2113 = vcmp.eq.f32.partialorder %v2110, %v2112
      %v2114 = vsel %vm2113, %v2109, inf
      %2115 = vmin.xlane.f32.xlu0 %v2114
      %v2116 = vpop.xlane.xlu0 %2115
      %v2117 = vcvt.f32.s32 %v2116
      %v2118 = vcvt.f32.s32 %v2112
      %v2119 = vshll.u32 %v2118, 16
      %v2120 = vadd.s32 %v2119, %v2117
      %v2121 = vsel %vm381, %v2015, 2147483647
      %v2122 = vand.u32 %v2121, 65535
      %v2123 = vshra.s32 %v2121, 16
      %v2124 = vcvt.s32.f32 %v2122
      %v2125 = vcvt.s32.f32 %v2123
      %2126 = vmin.xlane.f32.xlu0 %v2125
      %v2127 = vpop.xlane.xlu0 %2126
      %vm2128 = vcmp.eq.f32.partialorder %v2125, %v2127
      %v2129 = vsel %vm2128, %v2124, inf
      %2130 = vmin.xlane.f32.xlu0 %v2129
      %v2131 = vpop.xlane.xlu0 %2130
      %v2132 = vcvt.f32.s32 %v2131
      %v2133 = vcvt.f32.s32 %v2127
      %v2134 = vshll.u32 %v2133, 16
      %v2135 = vadd.s32 %v2134, %v2132
      %vm2136 = vcmp.eq.s32.totalorder %v356, %v2030
      %vm2137 = vcmp.eq.s32.totalorder %v356, %v2045
      %vm2138 = vcmp.eq.s32.totalorder %v356, %v2060
      %vm2139 = vcmp.eq.s32.totalorder %v356, %v2075
      %vm2140 = vcmp.eq.s32.totalorder %v356, %v2090
      %vm2141 = vcmp.eq.s32.totalorder %v356, %v2105
      %vm2142 = vcmp.eq.s32.totalorder %v356, %v2120
      %vm2143 = vcmp.eq.s32.totalorder %v356, %v2135
      %v2144 = vsel %vm2136, 1, 0
      %v2145 = vsel %vm2137, 1, 0
      %v2146 = vsel %vm2138, 1, 0
      %v2147 = vsel %vm2139, 1, 0
      %v2148 = vsel %vm2140, 1, 0
      %v2149 = vsel %vm2141, 1, 0
      %v2150 = vsel %vm2142, 1, 0
      %v2151 = vsel %vm2143, 1, 0
      %v2152 = vcvt.s32.f32 %v2144
      %v2153 = vcvt.s32.f32 %v2145
      %v2154 = vcvt.s32.f32 %v2146
      %v2155 = vcvt.s32.f32 %v2147
      %v2156 = vcvt.s32.f32 %v2148
      %v2157 = vcvt.s32.f32 %v2149
      %v2158 = vcvt.s32.f32 %v2150
      %v2159 = vcvt.s32.f32 %v2151
      %v2160 = vpack.c.bf16 %v2153, %v2152
      %v2161 = vpack.c.bf16 %v2155, %v2154
      %v2162 = vpack.c.bf16 %v2157, %v2156
      %v2163 = vpack.c.bf16 %v2159, %v2158
      %v2165 = vsel %vm381, %v2160, 0
      %v2168 = vsel %vm381, %v2161, 0
      %v2171 = vsel %vm381, %v2162, 0
      %v2174 = vsel %vm381, %v2163, 0
      %2176 = vmatpush.bf16.xpose.msra.mxu0 0
      %2177 = vmatpush.bf16.xpose.msra.mxu0 0
      %2178 = vmatpush.bf16.xpose.msra.mxu0 0
      %2179 = vmatpush.bf16.xpose.msra.mxu0 0
      %2180 = vmatpush.bf16.xpose.msra.mxu0 0
      %2181 = vmatpush.bf16.xpose.msra.mxu0 0
      %2182 = vmatpush.bf16.xpose.msra.mxu0 %v602
      %2183 = vmatpush.bf16.xpose.msra.mxu0 %v599
      %2184 = vmatmul.bf16.gmra.mxu0 %v2165
      %v2185 = vpop.f32.mrf.mxu0
      %v2186 = vadd.f32 0.0, %v2185
      %v2187 = vpop.f32.mrf.mxu0
      %v2188 = vadd.f32 0.0, %v2187
      %2189 = vmatmul.bf16.gmra.mxu0 %v2168
      %v2190 = vpop.f32.mrf.mxu0
      %v2191 = vadd.f32 0.0, %v2190
      %v2192 = vpop.f32.mrf.mxu0
      %v2193 = vadd.f32 0.0, %v2192
      %2194 = vmatmul.bf16.gmra.mxu0 %v2171
      %v2195 = vpop.f32.mrf.mxu0
      %v2196 = vadd.f32 0.0, %v2195
      %v2197 = vpop.f32.mrf.mxu0
      %v2198 = vadd.f32 0.0, %v2197
      %2199 = vmatmul.bf16.gmra.mxu0 %v2174
      %v2200 = vpop.f32.mrf.mxu0
      %v2201 = vadd.f32 0.0, %v2200
      %v2202 = vpop.f32.mrf.mxu0
      %v2203 = vadd.f32 0.0, %v2202
      %2204 = vdwg.mxu0
      %v2205 = vsub.f32 %v2186, %v382
      %v2206 = vsub.f32 %v2188, %v383
      %v2207 = vsub.f32 %v2191, %v384
      %v2208 = vsub.f32 %v2193, %v385
      %v2209 = vsub.f32 %v2196, %v386
      %v2210 = vsub.f32 %v2198, %v387
      %v2211 = vsub.f32 %v2201, %v388
      %v2212 = vsub.f32 %v2203, %v389
      %v2213 = vpack.c.bf16 %v2205, %v2205
      %v2214 = vpack.c.bf16 %v2206, %v2206
      %v2215 = vpack.c.bf16 %v2207, %v2207
      %v2216 = vpack.c.bf16 %v2208, %v2208
      %v2217 = vpack.c.bf16 %v2209, %v2209
      %v2218 = vpack.c.bf16 %v2210, %v2210
      %v2219 = vpack.c.bf16 %v2211, %v2211
      %v2220 = vpack.c.bf16 %v2212, %v2212
      %s2221 = scalar_lea.vmem %s245, 192
      %2222 = vst.msk [vmem:[%s2221] sm:$0xf] %vm649, %v2213
      %2223 = vst.msk [vmem:[%s2221 + $0x4] sm:$0xf] %vm649, %v2214
      %2224 = vst.msk [vmem:[%s2221 + $0x8] sm:$0xf] %vm649, %v2215
      %2225 = vst.msk [vmem:[%s2221 + $0xc] sm:$0xf] %vm649, %v2216
      %2226 = vst.msk [vmem:[%s2221 + $0x10] sm:$0xf] %vm649, %v2217
      %2227 = vst.msk [vmem:[%s2221 + $0x14] sm:$0xf] %vm649, %v2218
      %2228 = vst.msk [vmem:[%s2221 + $0x18] sm:$0xf] %vm649, %v2219
      %2229 = vst.msk [vmem:[%s2221 + $0x1c] sm:$0xf] %vm649, %v2220
      %v2230 = vsel %vm2136, 1e+30, %v1968
      %v2231 = vsel %vm2137, 1e+30, %v1969
      %v2232 = vsel %vm2138, 1e+30, %v1970
      %v2233 = vsel %vm2139, 1e+30, %v1971
      %v2234 = vsel %vm2140, 1e+30, %v1972
      %v2235 = vsel %vm2141, 1e+30, %v1973
      %v2236 = vsel %vm2142, 1e+30, %v1974
      %v2237 = vsel %vm2143, 1e+30, %v1975
      %v2238 = vsel %vm381, %v2230, inf
      %2239 = vmin.xlane.f32.xlu0 %v2238
      %v2240 = vpop.xlane.xlu0 %2239
      %v2241 = vsel %vm381, %v2231, inf
      %2242 = vmin.xlane.f32.xlu0 %v2241
      %v2243 = vpop.xlane.xlu0 %2242
      %v2244 = vsel %vm381, %v2232, inf
      %2245 = vmin.xlane.f32.xlu0 %v2244
      %v2246 = vpop.xlane.xlu0 %2245
      %v2247 = vsel %vm381, %v2233, inf
      %2248 = vmin.xlane.f32.xlu0 %v2247
      %v2249 = vpop.xlane.xlu0 %2248
      %v2250 = vsel %vm381, %v2234, inf
      %2251 = vmin.xlane.f32.xlu0 %v2250
      %v2252 = vpop.xlane.xlu0 %2251
      %v2253 = vsel %vm381, %v2235, inf
      %2254 = vmin.xlane.f32.xlu0 %v2253
      %v2255 = vpop.xlane.xlu0 %2254
      %v2256 = vsel %vm381, %v2236, inf
      %2257 = vmin.xlane.f32.xlu0 %v2256
      %v2258 = vpop.xlane.xlu0 %2257
      %v2259 = vsel %vm381, %v2237, inf
      %2260 = vmin.xlane.f32.xlu0 %v2259
      %v2261 = vpop.xlane.xlu0 %2260
      %vm2262 = vcmp.le.f32.partialorder %v2230, %v2240
      %vm2263 = vcmp.le.f32.partialorder %v2231, %v2243
      %vm2264 = vcmp.le.f32.partialorder %v2232, %v2246
      %vm2265 = vcmp.le.f32.partialorder %v2233, %v2249
      %vm2266 = vcmp.le.f32.partialorder %v2234, %v2252
      %vm2267 = vcmp.le.f32.partialorder %v2235, %v2255
      %vm2268 = vcmp.le.f32.partialorder %v2236, %v2258
      %vm2269 = vcmp.le.f32.partialorder %v2237, %v2261
      %v2270 = vsel %vm2262, %v356, 16
      %v2271 = vsel %vm2263, %v356, 16
      %v2272 = vsel %vm2264, %v356, 16
      %v2273 = vsel %vm2265, %v356, 16
      %v2274 = vsel %vm2266, %v356, 16
      %v2275 = vsel %vm2267, %v356, 16
      %v2276 = vsel %vm2268, %v356, 16
      %v2277 = vsel %vm2269, %v356, 16
      %v2278 = vsel %vm381, %v2270, 2147483647
      %v2279 = vand.u32 %v2278, 65535
      %v2280 = vshra.s32 %v2278, 16
      %v2281 = vcvt.s32.f32 %v2279
      %v2282 = vcvt.s32.f32 %v2280
      %2283 = vmin.xlane.f32.xlu0 %v2282
      %v2284 = vpop.xlane.xlu0 %2283
      %vm2285 = vcmp.eq.f32.partialorder %v2282, %v2284
      %v2286 = vsel %vm2285, %v2281, inf
      %2287 = vmin.xlane.f32.xlu0 %v2286
      %v2288 = vpop.xlane.xlu0 %2287
      %v2289 = vcvt.f32.s32 %v2288
      %v2290 = vcvt.f32.s32 %v2284
      %v2291 = vshll.u32 %v2290, 16
      %v2292 = vadd.s32 %v2291, %v2289
      %v2293 = vsel %vm381, %v2271, 2147483647
      %v2294 = vand.u32 %v2293, 65535
      %v2295 = vshra.s32 %v2293, 16
      %v2296 = vcvt.s32.f32 %v2294
      %v2297 = vcvt.s32.f32 %v2295
      %2298 = vmin.xlane.f32.xlu0 %v2297
      %v2299 = vpop.xlane.xlu0 %2298
      %vm2300 = vcmp.eq.f32.partialorder %v2297, %v2299
      %v2301 = vsel %vm2300, %v2296, inf
      %2302 = vmin.xlane.f32.xlu0 %v2301
      %v2303 = vpop.xlane.xlu0 %2302
      %v2304 = vcvt.f32.s32 %v2303
      %v2305 = vcvt.f32.s32 %v2299
      %v2306 = vshll.u32 %v2305, 16
      %v2307 = vadd.s32 %v2306, %v2304
      %v2308 = vsel %vm381, %v2272, 2147483647
      %v2309 = vand.u32 %v2308, 65535
      %v2310 = vshra.s32 %v2308, 16
      %v2311 = vcvt.s32.f32 %v2309
      %v2312 = vcvt.s32.f32 %v2310
      %2313 = vmin.xlane.f32.xlu0 %v2312
      %v2314 = vpop.xlane.xlu0 %2313
      %vm2315 = vcmp.eq.f32.partialorder %v2312, %v2314
      %v2316 = vsel %vm2315, %v2311, inf
      %2317 = vmin.xlane.f32.xlu0 %v2316
      %v2318 = vpop.xlane.xlu0 %2317
      %v2319 = vcvt.f32.s32 %v2318
      %v2320 = vcvt.f32.s32 %v2314
      %v2321 = vshll.u32 %v2320, 16
      %v2322 = vadd.s32 %v2321, %v2319
      %v2323 = vsel %vm381, %v2273, 2147483647
      %v2324 = vand.u32 %v2323, 65535
      %v2325 = vshra.s32 %v2323, 16
      %v2326 = vcvt.s32.f32 %v2324
      %v2327 = vcvt.s32.f32 %v2325
      %2328 = vmin.xlane.f32.xlu0 %v2327
      %v2329 = vpop.xlane.xlu0 %2328
      %vm2330 = vcmp.eq.f32.partialorder %v2327, %v2329
      %v2331 = vsel %vm2330, %v2326, inf
      %2332 = vmin.xlane.f32.xlu0 %v2331
      %v2333 = vpop.xlane.xlu0 %2332
      %v2334 = vcvt.f32.s32 %v2333
      %v2335 = vcvt.f32.s32 %v2329
      %v2336 = vshll.u32 %v2335, 16
      %v2337 = vadd.s32 %v2336, %v2334
      %v2338 = vsel %vm381, %v2274, 2147483647
      %v2339 = vand.u32 %v2338, 65535
      %v2340 = vshra.s32 %v2338, 16
      %v2341 = vcvt.s32.f32 %v2339
      %v2342 = vcvt.s32.f32 %v2340
      %2343 = vmin.xlane.f32.xlu0 %v2342
      %v2344 = vpop.xlane.xlu0 %2343
      %vm2345 = vcmp.eq.f32.partialorder %v2342, %v2344
      %v2346 = vsel %vm2345, %v2341, inf
      %2347 = vmin.xlane.f32.xlu0 %v2346
      %v2348 = vpop.xlane.xlu0 %2347
      %v2349 = vcvt.f32.s32 %v2348
      %v2350 = vcvt.f32.s32 %v2344
      %v2351 = vshll.u32 %v2350, 16
      %v2352 = vadd.s32 %v2351, %v2349
      %v2353 = vsel %vm381, %v2275, 2147483647
      %v2354 = vand.u32 %v2353, 65535
      %v2355 = vshra.s32 %v2353, 16
      %v2356 = vcvt.s32.f32 %v2354
      %v2357 = vcvt.s32.f32 %v2355
      %2358 = vmin.xlane.f32.xlu0 %v2357
      %v2359 = vpop.xlane.xlu0 %2358
      %vm2360 = vcmp.eq.f32.partialorder %v2357, %v2359
      %v2361 = vsel %vm2360, %v2356, inf
      %2362 = vmin.xlane.f32.xlu0 %v2361
      %v2363 = vpop.xlane.xlu0 %2362
      %v2364 = vcvt.f32.s32 %v2363
      %v2365 = vcvt.f32.s32 %v2359
      %v2366 = vshll.u32 %v2365, 16
      %v2367 = vadd.s32 %v2366, %v2364
      %v2368 = vsel %vm381, %v2276, 2147483647
      %v2369 = vand.u32 %v2368, 65535
      %v2370 = vshra.s32 %v2368, 16
      %v2371 = vcvt.s32.f32 %v2369
      %v2372 = vcvt.s32.f32 %v2370
      %2373 = vmin.xlane.f32.xlu0 %v2372
      %v2374 = vpop.xlane.xlu0 %2373
      %vm2375 = vcmp.eq.f32.partialorder %v2372, %v2374
      %v2376 = vsel %vm2375, %v2371, inf
      %2377 = vmin.xlane.f32.xlu0 %v2376
      %v2378 = vpop.xlane.xlu0 %2377
      %v2379 = vcvt.f32.s32 %v2378
      %v2380 = vcvt.f32.s32 %v2374
      %v2381 = vshll.u32 %v2380, 16
      %v2382 = vadd.s32 %v2381, %v2379
      %v2383 = vsel %vm381, %v2277, 2147483647
      %v2384 = vand.u32 %v2383, 65535
      %v2385 = vshra.s32 %v2383, 16
      %v2386 = vcvt.s32.f32 %v2384
      %v2387 = vcvt.s32.f32 %v2385
      %2388 = vmin.xlane.f32.xlu0 %v2387
      %v2389 = vpop.xlane.xlu0 %2388
      %vm2390 = vcmp.eq.f32.partialorder %v2387, %v2389
      %v2391 = vsel %vm2390, %v2386, inf
      %2392 = vmin.xlane.f32.xlu0 %v2391
      %v2393 = vpop.xlane.xlu0 %2392
      %v2394 = vcvt.f32.s32 %v2393
      %v2395 = vcvt.f32.s32 %v2389
      %v2396 = vshll.u32 %v2395, 16
      %v2397 = vadd.s32 %v2396, %v2394
      %vm2398 = vcmp.eq.s32.totalorder %v356, %v2292
      %vm2399 = vcmp.eq.s32.totalorder %v356, %v2307
      %vm2400 = vcmp.eq.s32.totalorder %v356, %v2322
      %vm2401 = vcmp.eq.s32.totalorder %v356, %v2337
      %vm2402 = vcmp.eq.s32.totalorder %v356, %v2352
      %vm2403 = vcmp.eq.s32.totalorder %v356, %v2367
      %vm2404 = vcmp.eq.s32.totalorder %v356, %v2382
      %vm2405 = vcmp.eq.s32.totalorder %v356, %v2397
      %v2406 = vsel %vm2398, 1, 0
      %v2407 = vsel %vm2399, 1, 0
      %v2408 = vsel %vm2400, 1, 0
      %v2409 = vsel %vm2401, 1, 0
      %v2410 = vsel %vm2402, 1, 0
      %v2411 = vsel %vm2403, 1, 0
      %v2412 = vsel %vm2404, 1, 0
      %v2413 = vsel %vm2405, 1, 0
      %v2414 = vcvt.s32.f32 %v2406
      %v2415 = vcvt.s32.f32 %v2407
      %v2416 = vcvt.s32.f32 %v2408
      %v2417 = vcvt.s32.f32 %v2409
      %v2418 = vcvt.s32.f32 %v2410
      %v2419 = vcvt.s32.f32 %v2411
      %v2420 = vcvt.s32.f32 %v2412
      %v2421 = vcvt.s32.f32 %v2413
      %v2422 = vpack.c.bf16 %v2415, %v2414
      %v2423 = vpack.c.bf16 %v2417, %v2416
      %v2424 = vpack.c.bf16 %v2419, %v2418
      %v2425 = vpack.c.bf16 %v2421, %v2420
      %v2427 = vsel %vm381, %v2422, 0
      %v2430 = vsel %vm381, %v2423, 0
      %v2433 = vsel %vm381, %v2424, 0
      %v2436 = vsel %vm381, %v2425, 0
      %2438 = vmatpush.bf16.xpose.msra.mxu0 0
      %2439 = vmatpush.bf16.xpose.msra.mxu0 0
      %2440 = vmatpush.bf16.xpose.msra.mxu0 0
      %2441 = vmatpush.bf16.xpose.msra.mxu0 0
      %2442 = vmatpush.bf16.xpose.msra.mxu0 0
      %2443 = vmatpush.bf16.xpose.msra.mxu0 0
      %2444 = vmatpush.bf16.xpose.msra.mxu0 %v602
      %2445 = vmatpush.bf16.xpose.msra.mxu0 %v599
      %2446 = vmatmul.bf16.gmra.mxu0 %v2427
      %v2447 = vpop.f32.mrf.mxu0
      %v2448 = vadd.f32 0.0, %v2447
      %v2449 = vpop.f32.mrf.mxu0
      %v2450 = vadd.f32 0.0, %v2449
      %2451 = vmatmul.bf16.gmra.mxu0 %v2430
      %v2452 = vpop.f32.mrf.mxu0
      %v2453 = vadd.f32 0.0, %v2452
      %v2454 = vpop.f32.mrf.mxu0
      %v2455 = vadd.f32 0.0, %v2454
      %2456 = vmatmul.bf16.gmra.mxu0 %v2433
      %v2457 = vpop.f32.mrf.mxu0
      %v2458 = vadd.f32 0.0, %v2457
      %v2459 = vpop.f32.mrf.mxu0
      %v2460 = vadd.f32 0.0, %v2459
      %2461 = vmatmul.bf16.gmra.mxu0 %v2436
      %v2462 = vpop.f32.mrf.mxu0
      %v2463 = vadd.f32 0.0, %v2462
      %v2464 = vpop.f32.mrf.mxu0
      %v2465 = vadd.f32 0.0, %v2464
      %2466 = vdwg.mxu0
      %v2467 = vsub.f32 %v2448, %v382
      %v2468 = vsub.f32 %v2450, %v383
      %v2469 = vsub.f32 %v2453, %v384
      %v2470 = vsub.f32 %v2455, %v385
      %v2471 = vsub.f32 %v2458, %v386
      %v2472 = vsub.f32 %v2460, %v387
      %v2473 = vsub.f32 %v2463, %v388
      %v2474 = vsub.f32 %v2465, %v389
      %v2475 = vpack.c.bf16 %v2467, %v2467
      %v2476 = vpack.c.bf16 %v2468, %v2468
      %v2477 = vpack.c.bf16 %v2469, %v2469
      %v2478 = vpack.c.bf16 %v2470, %v2470
      %v2479 = vpack.c.bf16 %v2471, %v2471
      %v2480 = vpack.c.bf16 %v2472, %v2472
      %v2481 = vpack.c.bf16 %v2473, %v2473
      %v2482 = vpack.c.bf16 %v2474, %v2474
      %s2483 = scalar_lea.vmem %s245, 224
      %2484 = vst.msk [vmem:[%s2483] sm:$0xf] %vm649, %v2475
      %2485 = vst.msk [vmem:[%s2483 + $0x4] sm:$0xf] %vm649, %v2476
      %2486 = vst.msk [vmem:[%s2483 + $0x8] sm:$0xf] %vm649, %v2477
      %2487 = vst.msk [vmem:[%s2483 + $0xc] sm:$0xf] %vm649, %v2478
      %2488 = vst.msk [vmem:[%s2483 + $0x10] sm:$0xf] %vm649, %v2479
      %2489 = vst.msk [vmem:[%s2483 + $0x14] sm:$0xf] %vm649, %v2480
      %2490 = vst.msk [vmem:[%s2483 + $0x18] sm:$0xf] %vm649, %v2481
      %2491 = vst.msk [vmem:[%s2483 + $0x1c] sm:$0xf] %vm649, %v2482
      %s2492 = smul.u32 8, %s19
      %p2493 = scmp.lt.s32.totalorder %s18, 1
      %s2494 = scalar_select %p2493, %s18, 1
      %p2495 = scmp.lt.s32.totalorder %s2492, 7
      %s2496 = scalar_select %p2495, %s2492, 7
      %s2497 = smul.addr %s2494, 64
      %s2498 = sadd.s32 %s2496, %s2497
      %s2499 = smul.addr %s2498, 4
      %s2500 = scalar_lea.vmem %s3, %s2499
      // Predicated region
      $region33: #{tpu_custom_call.1} parent=31 // pred_check
        %p2501 = pneg %p126
      $region34: #{tpu_custom_call.1} parent=31 // pred_check_branch
        %2503 = sbr.rel (%p2501) target = $region36
      $region35: #{tpu_custom_call.1} parent=31 // pred_region
        %s2504 = smul.u32 8, %s19
      $region36: #{tpu_custom_call.1} parent=31 // pred_fallthru
        _
    $region32: #{tpu_custom_call.1} parent=5 // pred_fallthru
      _
    %p2505 = scmp.le.s32.totalorder 2, %s9
    // Predicated region
    $region37: #{tpu_custom_call.1} parent=5 // pred_check
      %p2506 = pneg %p2505
    $region38: #{tpu_custom_call.1} parent=5 // pred_check_branch
      %2508 = sbr.rel (%p2506) target = $region40
    $region39: #{tpu_custom_call.1} parent=5 // pred_region
      %s2509 = ssub.s32 %s9, 2
      // Predicated region
      $region41: #{tpu_custom_call.1} parent=39 // pred_check
        %p2510 = pneg %p132
      $region42: #{tpu_custom_call.1} parent=39 // pred_check_branch
        %2512 = sbr.rel (%p2510) target = $region44
      $region43: #{tpu_custom_call.1} parent=39 // pred_region
        %s2513 = smul.u32 8, %s21
        %p2514 = scmp.lt.s32.totalorder %s20, 1
        %s2515 = scalar_select %p2514, %s20, 1
        %p2516 = scmp.lt.s32.totalorder %s2513, 7
        %s2517 = scalar_select %p2516, %s2513, 7
        %s2518 = smul.addr %s2515, 64
        %s2519 = sadd.s32 %s2517, %s2518
        %s2520 = smul.addr %s2519, 4
        %s2521 = scalar_lea.vmem %s3, %s2520
      $region44: #{tpu_custom_call.1} parent=39 // pred_fallthru
        _
    $region40: #{tpu_custom_call.1} parent=5 // pred_fallthru
      _
  $region6: #{tpu_custom_call.1} parent=0 // loop_footer
    %s13 = sadd.s32 1, %s9
  $region7: #{tpu_custom_call.1} parent=0 // loop_footer_branch
    %8 = sbr.rel target = $region3
  $region8: #{tpu_custom_call.1} parent=0 // loop_exit
    _

</llo_original>
